<compile_context>
chip_gen: v5e
topology: v5e:2x2
jax: 0.10.0
libtpu: 0.0.40
codegen_flags: <defaults>
</compile_context>

<pallas_src>
import functools

import jax
import jax.numpy as jnp
from jax.experimental import pallas as pl
from jax.experimental.pallas import tpu as pltpu

EPS = 1e-5
NEG_SLOPE = 0.2
KH = KW = 4
STRIDE = 2
PAD = 1


def _round_up(x, m):
    return ((x + m - 1) // m) * m


def unet_down_kernel(xp_ref, w_ref, o_ref, *, normalize, oh, ow):
    """One batch sample per grid step.

    xp_ref: (4, OH+1, OW+1, C_in) bf16 -- 4 stride-2 phase sub-images of the padded input
    w_ref : (16, C_in, Cp)        bf16 -- per-tap weights, C_out zero-padded to Cp lanes
    o_ref : (S, Cp)               f32  -- S = OH*OW, lane-dense output block
    """
    s = oh * ow
    c_in = xp_ref.shape[-1]
    cp = w_ref.shape[-1]

    # Conv2d(k=4, s=2, p=1) as 16 accumulated tap-matmuls on the MXU (f32 accumulate).
    acc = jnp.zeros((s, cp), jnp.float32)
    for kh in range(KH):
        for kw in range(KW):
            p = (kh % 2) * 2 + (kw % 2)          # which stride-2 phase sub-image
            r0 = kh // 2                          # row offset within the phase image
            c0 = kw // 2                          # col offset within the phase image
            tap = xp_ref[p, r0:r0 + oh, c0:c0 + ow, :]      # (OH, OW, C_in) bf16
            tap = tap.reshape(s, c_in)                      # (S, C_in)
            acc = acc + jnp.dot(tap, w_ref[kh * KW + kw],
                                preferred_element_type=jnp.float32)

    y = acc  # f32 epilogue (important on v5e: no bf16 VPU/EUP)

    if normalize:
        # InstanceNorm2d (affine=False, eps=1e-5, biased variance) over spatial S,
        # per (sample, channel).  Single-pass statistics: sum and sum-of-squares.
        inv_s = 1.0 / s
        s1 = jnp.sum(y, axis=0, keepdims=True)          # (1, Cp)
        s2 = jnp.sum(y * y, axis=0, keepdims=True)      # (1, Cp)
        mean = s1 * inv_s
        var = jnp.maximum(s2 * inv_s - mean * mean, 0.0)
        y = (y - mean) * jax.lax.rsqrt(var + EPS)       # rsqrt -> EUP slot (free-ish)

    # LeakyReLU(0.2)
    y = jnp.where(y >= 0, y, NEG_SLOPE * y)
    o_ref[...] = y.astype(o_ref.dtype)


def unet_down(x, w, *, normalize=True):
    """x: (N, C_in, H, W) f32, w: (C_out, C_in, 4, 4) f32 -> (N, C_out, H//2, W//2) f32."""
    N, C_in, H, W = x.shape
    C_out = w.shape[0]
    assert H % 2 == 0 and W % 2 == 0, "UNetDown expects even spatial dims (k=4, s=2, p=1)"
    OH, OW = H // STRIDE, W // STRIDE
    S = OH * OW
    Cp = _round_up(max(C_out, 128), 128)   # lane-dense output channels

    # ---- glue (no 16x expansion): NCHW -> NHWC, pad once, split into 4 stride-2 phases ----
    # NOTE: in a real UNet keep activations NHWC end-to-end to avoid these transposes.
    x_nhwc = jnp.transpose(x, (0, 2, 3, 1)).astype(jnp.bfloat16)           # (N, H, W, C_in)
    x_pad = jnp.pad(x_nhwc, ((0, 0), (PAD, PAD), (PAD, PAD), (0, 0)))      # (N, H+2, W+2, C_in)
    # xp[n*4 + ph*2 + pw, i, j, c] = x_pad[n, 2*i + ph, 2*j + pw, c]
    xp = x_pad.reshape(N, OH + 1, 2, OW + 1, 2, C_in)
    xp = xp.transpose(0, 2, 4, 1, 3, 5).reshape(N * 4, OH + 1, OW + 1, C_in)

    # weight -> (16 taps, C_in, Cp) bf16, tap index = kh*4 + kw, C_out zero-padded to Cp.
    w_taps = jnp.transpose(w, (2, 3, 1, 0)).reshape(KH * KW, C_in, C_out)
    w_taps = jnp.pad(w_taps, ((0, 0), (0, 0), (0, Cp - C_out))).astype(jnp.bfloat16)

    kernel = functools.partial(unet_down_kernel, normalize=normalize, oh=OH, ow=OW)

    out = pl.pallas_call(
        kernel,
        out_shape=jax.ShapeDtypeStruct((N, S, Cp), jnp.float32),
        grid_spec=pltpu.PrefetchScalarGridSpec(
            num_scalar_prefetch=0,
            grid=(N,),
            in_specs=[
                # 4 phase sub-images of one sample per step.
                pl.BlockSpec((4, OH + 1, OW + 1, C_in), lambda b: (b, 0, 0, 0)),
                # Weights: constant index_map -> fetched once, re-used across grid steps.
                # (For deep layers, also use pipeline_mode=pl.Buffered(1) to drop the
                #  second buffer; negligible here at 16 KiB.)
                pl.BlockSpec((KH * KW, C_in, Cp), lambda b: (0, 0, 0)),
            ],
            out_specs=pl.BlockSpec((None, S, Cp), lambda b: (b, 0, 0)),
        ),
        compiler_params=pltpu.CompilerParams(
            dimension_semantics=("parallel",),
            vmem_limit_bytes=48 * 1024 * 1024,   # headroom-safe on v7x's 64 MiB VMEM too
        ),
    )(xp, w_taps)

    # slice off the channel pad, back to NCHW (module contract).
    out = out[:, :, :C_out].reshape(N, OH, OW, C_out)
    return jnp.transpose(out, (0, 3, 1, 2)).astype(x.dtype)


def unet_down_ref(x, w, *, normalize=True):
    """Pure-JAX f32 reference mirroring the PyTorch module."""
    y = jax.lax.conv_general_dilated(
        x, w, window_strides=(STRIDE, STRIDE), padding=((PAD, PAD), (PAD, PAD)),
        dimension_numbers=("NCHW", "OIHW", "NCHW"))
    if normalize:
        mean = y.mean(axis=(2, 3), keepdims=True)
        var = ((y - mean) ** 2).mean(axis=(2, 3), keepdims=True)
        y = (y - mean) / jnp.sqrt(var + EPS)
    return jnp.where(y >= 0, y, NEG_SLOPE * y)


if __name__ == "__main__":
    # Small shapes consistent with UNetDown(in_channels=4, out_channels=8)
    N, C_in, H, W = 2, 4, 16, 16
    C_out = 8

    key = jax.random.PRNGKey(0)
    kx, kw = jax.random.split(key)
    x = jax.random.normal(kx, (N, C_in, H, W), dtype=jnp.float32)
    fan_in = C_in * KH * KW
    w = jax.random.normal(kw, (C_out, C_in, KH, KW), dtype=jnp.float32) / jnp.sqrt(fan_in)

    out = unet_down(x, w, normalize=True)
    out = jax.block_until_ready(out)

    ref = unet_down_ref(x, w, normalize=True)
    assert out.shape == (N, C_out, H // 2, W // 2), out.shape
    max_err = float(jnp.max(jnp.abs(out - ref)))
    # bf16 MXU operands with f32 accumulation -> slightly looser tolerance than pure f32.
    assert jnp.allclose(out, ref, atol=3e-2, rtol=3e-2), max_err

    print("KERNEL_OK")
</pallas_src>

<mosaic_0001>
module attributes {stable_mosaic.version = 11 : i64} {
  func.func @unet_down_kernel(%arg0: i32, %arg1: memref<4x9x9x4xbf16, #tpu.memory_space<vmem>>, %arg2: memref<16x4x128xbf16, #tpu.memory_space<vmem>>, %arg3: memref<1x64x128xf32, #tpu.memory_space<vmem>>) attributes {dimension_semantics = [#tpu.dimension_semantics<parallel>], iteration_bounds = array<i64: 2>, scalar_prefetch = 0 : i64, scratch_operands = 0 : i64, tpu.core_type = #tpu.core_type<tc>, window_params = [{transform_indices = @transform_0, window_bounds = array<i64: 4, 9, 9, 4>}, {pipeline_mode = #tpu.pipeline_mode<synchronous>, transform_indices = @transform_1, window_bounds = array<i64: 16, 4, 128>}, {transform_indices = @transform_2, window_bounds = array<i64: 1, 64, 128>}]} {
    %cst = arith.constant 0.000000e+00 : f32
    %0 = vector.broadcast %cst : f32 to vector<64x128xf32>
    %c0 = arith.constant 0 : index
    %c0_0 = arith.constant 0 : index
    %c0_1 = arith.constant 0 : index
    %c0_2 = arith.constant 0 : index
    %1 = vector.load %arg1[%c0, %c0_0, %c0_1, %c0_2] : memref<4x9x9x4xbf16, #tpu.memory_space<vmem>>, vector<1x8x8x4xbf16>
    %2 = vector.shape_cast %1 : vector<1x8x8x4xbf16> to vector<8x8x4xbf16>
    %3 = vector.shape_cast %2 : vector<8x8x4xbf16> to vector<64x4xbf16>
    %c0_3 = arith.constant 0 : index
    %c0_4 = arith.constant 0 : index
    %c0_5 = arith.constant 0 : index
    %4 = vector.load %arg2[%c0_3, %c0_4, %c0_5] : memref<16x4x128xbf16, #tpu.memory_space<vmem>>, vector<1x4x128xbf16>
    %5 = vector.shape_cast %4 : vector<1x4x128xbf16> to vector<4x128xbf16>
    %cst_6 = arith.constant dense<0.000000e+00> : vector<64x128xf32>
    %6 = tpu.matmul %3, %5, %cst_6 {dimension_numbers = #tpu.dot_dimension_numbers<[1], [0], [0], [1], [0, 0, 1, 1], [], []>} : vector<64x4xbf16>, vector<4x128xbf16>, vector<64x128xf32> -> vector<64x128xf32>
    %7 = arith.addf %0, %6 : vector<64x128xf32>
    %c1 = arith.constant 1 : index
    %c0_7 = arith.constant 0 : index
    %c0_8 = arith.constant 0 : index
    %c0_9 = arith.constant 0 : index
    %8 = vector.load %arg1[%c1, %c0_7, %c0_8, %c0_9] : memref<4x9x9x4xbf16, #tpu.memory_space<vmem>>, vector<1x8x8x4xbf16>
    %9 = vector.shape_cast %8 : vector<1x8x8x4xbf16> to vector<8x8x4xbf16>
    %10 = vector.shape_cast %9 : vector<8x8x4xbf16> to vector<64x4xbf16>
    %c1_10 = arith.constant 1 : index
    %c0_11 = arith.constant 0 : index
    %c0_12 = arith.constant 0 : index
    %11 = vector.load %arg2[%c1_10, %c0_11, %c0_12] : memref<16x4x128xbf16, #tpu.memory_space<vmem>>, vector<1x4x128xbf16>
    %12 = vector.shape_cast %11 : vector<1x4x128xbf16> to vector<4x128xbf16>
    %cst_13 = arith.constant dense<0.000000e+00> : vector<64x128xf32>
    %13 = tpu.matmul %10, %12, %cst_13 {dimension_numbers = #tpu.dot_dimension_numbers<[1], [0], [0], [1], [0, 0, 1, 1], [], []>} : vector<64x4xbf16>, vector<4x128xbf16>, vector<64x128xf32> -> vector<64x128xf32>
    %14 = arith.addf %7, %13 : vector<64x128xf32>
    %c0_14 = arith.constant 0 : index
    %c0_15 = arith.constant 0 : index
    %c1_16 = arith.constant 1 : index
    %c0_17 = arith.constant 0 : index
    %15 = vector.load %arg1[%c0_14, %c0_15, %c1_16, %c0_17] : memref<4x9x9x4xbf16, #tpu.memory_space<vmem>>, vector<1x8x8x4xbf16>
    %16 = vector.shape_cast %15 : vector<1x8x8x4xbf16> to vector<8x8x4xbf16>
    %17 = vector.shape_cast %16 : vector<8x8x4xbf16> to vector<64x4xbf16>
    %c2 = arith.constant 2 : index
    %c0_18 = arith.constant 0 : index
    %c0_19 = arith.constant 0 : index
    %18 = vector.load %arg2[%c2, %c0_18, %c0_19] : memref<16x4x128xbf16, #tpu.memory_space<vmem>>, vector<1x4x128xbf16>
    %19 = vector.shape_cast %18 : vector<1x4x128xbf16> to vector<4x128xbf16>
    %cst_20 = arith.constant dense<0.000000e+00> : vector<64x128xf32>
    %20 = tpu.matmul %17, %19, %cst_20 {dimension_numbers = #tpu.dot_dimension_numbers<[1], [0], [0], [1], [0, 0, 1, 1], [], []>} : vector<64x4xbf16>, vector<4x128xbf16>, vector<64x128xf32> -> vector<64x128xf32>
    %21 = arith.addf %14, %20 : vector<64x128xf32>
    %c1_21 = arith.constant 1 : index
    %c0_22 = arith.constant 0 : index
    %c1_23 = arith.constant 1 : index
    %c0_24 = arith.constant 0 : index
    %22 = vector.load %arg1[%c1_21, %c0_22, %c1_23, %c0_24] : memref<4x9x9x4xbf16, #tpu.memory_space<vmem>>, vector<1x8x8x4xbf16>
    %23 = vector.shape_cast %22 : vector<1x8x8x4xbf16> to vector<8x8x4xbf16>
    %24 = vector.shape_cast %23 : vector<8x8x4xbf16> to vector<64x4xbf16>
    %c3 = arith.constant 3 : index
    %c0_25 = arith.constant 0 : index
    %c0_26 = arith.constant 0 : index
    %25 = vector.load %arg2[%c3, %c0_25, %c0_26] : memref<16x4x128xbf16, #tpu.memory_space<vmem>>, vector<1x4x128xbf16>
    %26 = vector.shape_cast %25 : vector<1x4x128xbf16> to vector<4x128xbf16>
    %cst_27 = arith.constant dense<0.000000e+00> : vector<64x128xf32>
    %27 = tpu.matmul %24, %26, %cst_27 {dimension_numbers = #tpu.dot_dimension_numbers<[1], [0], [0], [1], [0, 0, 1, 1], [], []>} : vector<64x4xbf16>, vector<4x128xbf16>, vector<64x128xf32> -> vector<64x128xf32>
    %28 = arith.addf %21, %27 : vector<64x128xf32>
    %c2_28 = arith.constant 2 : index
    %c0_29 = arith.constant 0 : index
    %c0_30 = arith.constant 0 : index
    %c0_31 = arith.constant 0 : index
    %29 = vector.load %arg1[%c2_28, %c0_29, %c0_30, %c0_31] : memref<4x9x9x4xbf16, #tpu.memory_space<vmem>>, vector<1x8x8x4xbf16>
    %30 = vector.shape_cast %29 : vector<1x8x8x4xbf16> to vector<8x8x4xbf16>
    %31 = vector.shape_cast %30 : vector<8x8x4xbf16> to vector<64x4xbf16>
    %c4 = arith.constant 4 : index
    %c0_32 = arith.constant 0 : index
    %c0_33 = arith.constant 0 : index
    %32 = vector.load %arg2[%c4, %c0_32, %c0_33] : memref<16x4x128xbf16, #tpu.memory_space<vmem>>, vector<1x4x128xbf16>
    %33 = vector.shape_cast %32 : vector<1x4x128xbf16> to vector<4x128xbf16>
    %cst_34 = arith.constant dense<0.000000e+00> : vector<64x128xf32>
    %34 = tpu.matmul %31, %33, %cst_34 {dimension_numbers = #tpu.dot_dimension_numbers<[1], [0], [0], [1], [0, 0, 1, 1], [], []>} : vector<64x4xbf16>, vector<4x128xbf16>, vector<64x128xf32> -> vector<64x128xf32>
    %35 = arith.addf %28, %34 : vector<64x128xf32>
    %c3_35 = arith.constant 3 : index
    %c0_36 = arith.constant 0 : index
    %c0_37 = arith.constant 0 : index
    %c0_38 = arith.constant 0 : index
    %36 = vector.load %arg1[%c3_35, %c0_36, %c0_37, %c0_38] : memref<4x9x9x4xbf16, #tpu.memory_space<vmem>>, vector<1x8x8x4xbf16>
    %37 = vector.shape_cast %36 : vector<1x8x8x4xbf16> to vector<8x8x4xbf16>
    %38 = vector.shape_cast %37 : vector<8x8x4xbf16> to vector<64x4xbf16>
    %c5 = arith.constant 5 : index
    %c0_39 = arith.constant 0 : index
    %c0_40 = arith.constant 0 : index
    %39 = vector.load %arg2[%c5, %c0_39, %c0_40] : memref<16x4x128xbf16, #tpu.memory_space<vmem>>, vector<1x4x128xbf16>
    %40 = vector.shape_cast %39 : vector<1x4x128xbf16> to vector<4x128xbf16>
    %cst_41 = arith.constant dense<0.000000e+00> : vector<64x128xf32>
    %41 = tpu.matmul %38, %40, %cst_41 {dimension_numbers = #tpu.dot_dimension_numbers<[1], [0], [0], [1], [0, 0, 1, 1], [], []>} : vector<64x4xbf16>, vector<4x128xbf16>, vector<64x128xf32> -> vector<64x128xf32>
    %42 = arith.addf %35, %41 : vector<64x128xf32>
    %c2_42 = arith.constant 2 : index
    %c0_43 = arith.constant 0 : index
    %c1_44 = arith.constant 1 : index
    %c0_45 = arith.constant 0 : index
    %43 = vector.load %arg1[%c2_42, %c0_43, %c1_44, %c0_45] : memref<4x9x9x4xbf16, #tpu.memory_space<vmem>>, vector<1x8x8x4xbf16>
    %44 = vector.shape_cast %43 : vector<1x8x8x4xbf16> to vector<8x8x4xbf16>
    %45 = vector.shape_cast %44 : vector<8x8x4xbf16> to vector<64x4xbf16>
    %c6 = arith.constant 6 : index
    %c0_46 = arith.constant 0 : index
    %c0_47 = arith.constant 0 : index
    %46 = vector.load %arg2[%c6, %c0_46, %c0_47] : memref<16x4x128xbf16, #tpu.memory_space<vmem>>, vector<1x4x128xbf16>
    %47 = vector.shape_cast %46 : vector<1x4x128xbf16> to vector<4x128xbf16>
    %cst_48 = arith.constant dense<0.000000e+00> : vector<64x128xf32>
    %48 = tpu.matmul %45, %47, %cst_48 {dimension_numbers = #tpu.dot_dimension_numbers<[1], [0], [0], [1], [0, 0, 1, 1], [], []>} : vector<64x4xbf16>, vector<4x128xbf16>, vector<64x128xf32> -> vector<64x128xf32>
    %49 = arith.addf %42, %48 : vector<64x128xf32>
    %c3_49 = arith.constant 3 : index
    %c0_50 = arith.constant 0 : index
    %c1_51 = arith.constant 1 : index
    %c0_52 = arith.constant 0 : index
    %50 = vector.load %arg1[%c3_49, %c0_50, %c1_51, %c0_52] : memref<4x9x9x4xbf16, #tpu.memory_space<vmem>>, vector<1x8x8x4xbf16>
    %51 = vector.shape_cast %50 : vector<1x8x8x4xbf16> to vector<8x8x4xbf16>
    %52 = vector.shape_cast %51 : vector<8x8x4xbf16> to vector<64x4xbf16>
    %c7 = arith.constant 7 : index
    %c0_53 = arith.constant 0 : index
    %c0_54 = arith.constant 0 : index
    %53 = vector.load %arg2[%c7, %c0_53, %c0_54] : memref<16x4x128xbf16, #tpu.memory_space<vmem>>, vector<1x4x128xbf16>
    %54 = vector.shape_cast %53 : vector<1x4x128xbf16> to vector<4x128xbf16>
    %cst_55 = arith.constant dense<0.000000e+00> : vector<64x128xf32>
    %55 = tpu.matmul %52, %54, %cst_55 {dimension_numbers = #tpu.dot_dimension_numbers<[1], [0], [0], [1], [0, 0, 1, 1], [], []>} : vector<64x4xbf16>, vector<4x128xbf16>, vector<64x128xf32> -> vector<64x128xf32>
    %56 = arith.addf %49, %55 : vector<64x128xf32>
    %c0_56 = arith.constant 0 : index
    %c1_57 = arith.constant 1 : index
    %c0_58 = arith.constant 0 : index
    %c0_59 = arith.constant 0 : index
    %57 = vector.load %arg1[%c0_56, %c1_57, %c0_58, %c0_59] : memref<4x9x9x4xbf16, #tpu.memory_space<vmem>>, vector<1x8x8x4xbf16>
    %58 = vector.shape_cast %57 : vector<1x8x8x4xbf16> to vector<8x8x4xbf16>
    %59 = vector.shape_cast %58 : vector<8x8x4xbf16> to vector<64x4xbf16>
    %c8 = arith.constant 8 : index
    %c0_60 = arith.constant 0 : index
    %c0_61 = arith.constant 0 : index
    %60 = vector.load %arg2[%c8, %c0_60, %c0_61] : memref<16x4x128xbf16, #tpu.memory_space<vmem>>, vector<1x4x128xbf16>
    %61 = vector.shape_cast %60 : vector<1x4x128xbf16> to vector<4x128xbf16>
    %cst_62 = arith.constant dense<0.000000e+00> : vector<64x128xf32>
    %62 = tpu.matmul %59, %61, %cst_62 {dimension_numbers = #tpu.dot_dimension_numbers<[1], [0], [0], [1], [0, 0, 1, 1], [], []>} : vector<64x4xbf16>, vector<4x128xbf16>, vector<64x128xf32> -> vector<64x128xf32>
    %63 = arith.addf %56, %62 : vector<64x128xf32>
    %c1_63 = arith.constant 1 : index
    %c1_64 = arith.constant 1 : index
    %c0_65 = arith.constant 0 : index
    %c0_66 = arith.constant 0 : index
    %64 = vector.load %arg1[%c1_63, %c1_64, %c0_65, %c0_66] : memref<4x9x9x4xbf16, #tpu.memory_space<vmem>>, vector<1x8x8x4xbf16>
    %65 = vector.shape_cast %64 : vector<1x8x8x4xbf16> to vector<8x8x4xbf16>
    %66 = vector.shape_cast %65 : vector<8x8x4xbf16> to vector<64x4xbf16>
    %c9 = arith.constant 9 : index
    %c0_67 = arith.constant 0 : index
    %c0_68 = arith.constant 0 : index
    %67 = vector.load %arg2[%c9, %c0_67, %c0_68] : memref<16x4x128xbf16, #tpu.memory_space<vmem>>, vector<1x4x128xbf16>
    %68 = vector.shape_cast %67 : vector<1x4x128xbf16> to vector<4x128xbf16>
    %cst_69 = arith.constant dense<0.000000e+00> : vector<64x128xf32>
    %69 = tpu.matmul %66, %68, %cst_69 {dimension_numbers = #tpu.dot_dimension_numbers<[1], [0], [0], [1], [0, 0, 1, 1], [], []>} : vector<64x4xbf16>, vector<4x128xbf16>, vector<64x128xf32> -> vector<64x128xf32>
    %70 = arith.addf %63, %69 : vector<64x128xf32>
    %c0_70 = arith.constant 0 : index
    %c1_71 = arith.constant 1 : index
    %c1_72 = arith.constant 1 : index
    %c0_73 = arith.constant 0 : index
    %71 = vector.load %arg1[%c0_70, %c1_71, %c1_72, %c0_73] : memref<4x9x9x4xbf16, #tpu.memory_space<vmem>>, vector<1x8x8x4xbf16>
    %72 = vector.shape_cast %71 : vector<1x8x8x4xbf16> to vector<8x8x4xbf16>
    %73 = vector.shape_cast %72 : vector<8x8x4xbf16> to vector<64x4xbf16>
    %c10 = arith.constant 10 : index
    %c0_74 = arith.constant 0 : index
    %c0_75 = arith.constant 0 : index
    %74 = vector.load %arg2[%c10, %c0_74, %c0_75] : memref<16x4x128xbf16, #tpu.memory_space<vmem>>, vector<1x4x128xbf16>
    %75 = vector.shape_cast %74 : vector<1x4x128xbf16> to vector<4x128xbf16>
    %cst_76 = arith.constant dense<0.000000e+00> : vector<64x128xf32>
    %76 = tpu.matmul %73, %75, %cst_76 {dimension_numbers = #tpu.dot_dimension_numbers<[1], [0], [0], [1], [0, 0, 1, 1], [], []>} : vector<64x4xbf16>, vector<4x128xbf16>, vector<64x128xf32> -> vector<64x128xf32>
    %77 = arith.addf %70, %76 : vector<64x128xf32>
    %c1_77 = arith.constant 1 : index
    %c1_78 = arith.constant 1 : index
    %c1_79 = arith.constant 1 : index
    %c0_80 = arith.constant 0 : index
    %78 = vector.load %arg1[%c1_77, %c1_78, %c1_79, %c0_80] : memref<4x9x9x4xbf16, #tpu.memory_space<vmem>>, vector<1x8x8x4xbf16>
    %79 = vector.shape_cast %78 : vector<1x8x8x4xbf16> to vector<8x8x4xbf16>
    %80 = vector.shape_cast %79 : vector<8x8x4xbf16> to vector<64x4xbf16>
    %c11 = arith.constant 11 : index
    %c0_81 = arith.constant 0 : index
    %c0_82 = arith.constant 0 : index
    %81 = vector.load %arg2[%c11, %c0_81, %c0_82] : memref<16x4x128xbf16, #tpu.memory_space<vmem>>, vector<1x4x128xbf16>
    %82 = vector.shape_cast %81 : vector<1x4x128xbf16> to vector<4x128xbf16>
    %cst_83 = arith.constant dense<0.000000e+00> : vector<64x128xf32>
    %83 = tpu.matmul %80, %82, %cst_83 {dimension_numbers = #tpu.dot_dimension_numbers<[1], [0], [0], [1], [0, 0, 1, 1], [], []>} : vector<64x4xbf16>, vector<4x128xbf16>, vector<64x128xf32> -> vector<64x128xf32>
    %84 = arith.addf %77, %83 : vector<64x128xf32>
    %c2_84 = arith.constant 2 : index
    %c1_85 = arith.constant 1 : index
    %c0_86 = arith.constant 0 : index
    %c0_87 = arith.constant 0 : index
    %85 = vector.load %arg1[%c2_84, %c1_85, %c0_86, %c0_87] : memref<4x9x9x4xbf16, #tpu.memory_space<vmem>>, vector<1x8x8x4xbf16>
    %86 = vector.shape_cast %85 : vector<1x8x8x4xbf16> to vector<8x8x4xbf16>
    %87 = vector.shape_cast %86 : vector<8x8x4xbf16> to vector<64x4xbf16>
    %c12 = arith.constant 12 : index
    %c0_88 = arith.constant 0 : index
    %c0_89 = arith.constant 0 : index
    %88 = vector.load %arg2[%c12, %c0_88, %c0_89] : memref<16x4x128xbf16, #tpu.memory_space<vmem>>, vector<1x4x128xbf16>
    %89 = vector.shape_cast %88 : vector<1x4x128xbf16> to vector<4x128xbf16>
    %cst_90 = arith.constant dense<0.000000e+00> : vector<64x128xf32>
    %90 = tpu.matmul %87, %89, %cst_90 {dimension_numbers = #tpu.dot_dimension_numbers<[1], [0], [0], [1], [0, 0, 1, 1], [], []>} : vector<64x4xbf16>, vector<4x128xbf16>, vector<64x128xf32> -> vector<64x128xf32>
    %91 = arith.addf %84, %90 : vector<64x128xf32>
    %c3_91 = arith.constant 3 : index
    %c1_92 = arith.constant 1 : index
    %c0_93 = arith.constant 0 : index
    %c0_94 = arith.constant 0 : index
    %92 = vector.load %arg1[%c3_91, %c1_92, %c0_93, %c0_94] : memref<4x9x9x4xbf16, #tpu.memory_space<vmem>>, vector<1x8x8x4xbf16>
    %93 = vector.shape_cast %92 : vector<1x8x8x4xbf16> to vector<8x8x4xbf16>
    %94 = vector.shape_cast %93 : vector<8x8x4xbf16> to vector<64x4xbf16>
    %c13 = arith.constant 13 : index
    %c0_95 = arith.constant 0 : index
    %c0_96 = arith.constant 0 : index
    %95 = vector.load %arg2[%c13, %c0_95, %c0_96] : memref<16x4x128xbf16, #tpu.memory_space<vmem>>, vector<1x4x128xbf16>
    %96 = vector.shape_cast %95 : vector<1x4x128xbf16> to vector<4x128xbf16>
    %cst_97 = arith.constant dense<0.000000e+00> : vector<64x128xf32>
    %97 = tpu.matmul %94, %96, %cst_97 {dimension_numbers = #tpu.dot_dimension_numbers<[1], [0], [0], [1], [0, 0, 1, 1], [], []>} : vector<64x4xbf16>, vector<4x128xbf16>, vector<64x128xf32> -> vector<64x128xf32>
    %98 = arith.addf %91, %97 : vector<64x128xf32>
    %c2_98 = arith.constant 2 : index
    %c1_99 = arith.constant 1 : index
    %c1_100 = arith.constant 1 : index
    %c0_101 = arith.constant 0 : index
    %99 = vector.load %arg1[%c2_98, %c1_99, %c1_100, %c0_101] : memref<4x9x9x4xbf16, #tpu.memory_space<vmem>>, vector<1x8x8x4xbf16>
    %100 = vector.shape_cast %99 : vector<1x8x8x4xbf16> to vector<8x8x4xbf16>
    %101 = vector.shape_cast %100 : vector<8x8x4xbf16> to vector<64x4xbf16>
    %c14 = arith.constant 14 : index
    %c0_102 = arith.constant 0 : index
    %c0_103 = arith.constant 0 : index
    %102 = vector.load %arg2[%c14, %c0_102, %c0_103] : memref<16x4x128xbf16, #tpu.memory_space<vmem>>, vector<1x4x128xbf16>
    %103 = vector.shape_cast %102 : vector<1x4x128xbf16> to vector<4x128xbf16>
    %cst_104 = arith.constant dense<0.000000e+00> : vector<64x128xf32>
    %104 = tpu.matmul %101, %103, %cst_104 {dimension_numbers = #tpu.dot_dimension_numbers<[1], [0], [0], [1], [0, 0, 1, 1], [], []>} : vector<64x4xbf16>, vector<4x128xbf16>, vector<64x128xf32> -> vector<64x128xf32>
    %105 = arith.addf %98, %104 : vector<64x128xf32>
    %c3_105 = arith.constant 3 : index
    %c1_106 = arith.constant 1 : index
    %c1_107 = arith.constant 1 : index
    %c0_108 = arith.constant 0 : index
    %106 = vector.load %arg1[%c3_105, %c1_106, %c1_107, %c0_108] : memref<4x9x9x4xbf16, #tpu.memory_space<vmem>>, vector<1x8x8x4xbf16>
    %107 = vector.shape_cast %106 : vector<1x8x8x4xbf16> to vector<8x8x4xbf16>
    %108 = vector.shape_cast %107 : vector<8x8x4xbf16> to vector<64x4xbf16>
    %c15 = arith.constant 15 : index
    %c0_109 = arith.constant 0 : index
    %c0_110 = arith.constant 0 : index
    %109 = vector.load %arg2[%c15, %c0_109, %c0_110] : memref<16x4x128xbf16, #tpu.memory_space<vmem>>, vector<1x4x128xbf16>
    %110 = vector.shape_cast %109 : vector<1x4x128xbf16> to vector<4x128xbf16>
    %cst_111 = arith.constant dense<0.000000e+00> : vector<64x128xf32>
    %111 = tpu.matmul %108, %110, %cst_111 {dimension_numbers = #tpu.dot_dimension_numbers<[1], [0], [0], [1], [0, 0, 1, 1], [], []>} : vector<64x4xbf16>, vector<4x128xbf16>, vector<64x128xf32> -> vector<64x128xf32>
    %112 = arith.addf %105, %111 : vector<64x128xf32>
    %cst_112 = arith.constant dense<0.000000e+00> : vector<128xf32>
    %113 = vector.multi_reduction <add>, %112, %cst_112 [0] : vector<64x128xf32> to vector<128xf32>
    %114 = vector.shape_cast %113 : vector<128xf32> to vector<1x128xf32>
    %115 = arith.mulf %112, %112 : vector<64x128xf32>
    %cst_113 = arith.constant dense<0.000000e+00> : vector<128xf32>
    %116 = vector.multi_reduction <add>, %115, %cst_113 [0] : vector<64x128xf32> to vector<128xf32>
    %117 = vector.shape_cast %116 : vector<128xf32> to vector<1x128xf32>
    %cst_114 = arith.constant 1.562500e-02 : f32
    %118 = vector.broadcast %cst_114 : f32 to vector<1x128xf32>
    %119 = arith.mulf %114, %118 : vector<1x128xf32>
    %cst_115 = arith.constant 1.562500e-02 : f32
    %120 = vector.broadcast %cst_115 : f32 to vector<1x128xf32>
    %121 = arith.mulf %117, %120 : vector<1x128xf32>
    %122 = arith.mulf %119, %119 : vector<1x128xf32>
    %123 = arith.subf %121, %122 : vector<1x128xf32>
    %cst_116 = arith.constant 0.000000e+00 : f32
    %124 = vector.broadcast %cst_116 : f32 to vector<1x128xf32>
    %125 = arith.maximumf %123, %124 : vector<1x128xf32>
    %126 = vector.broadcast %119 : vector<1x128xf32> to vector<64x128xf32>
    %127 = arith.subf %112, %126 : vector<64x128xf32>
    %cst_117 = arith.constant 9.99999974E-6 : f32
    %128 = vector.broadcast %cst_117 : f32 to vector<1x128xf32>
    %129 = arith.addf %125, %128 : vector<1x128xf32>
    %130 = math.rsqrt %129 : vector<1x128xf32>
    %131 = vector.broadcast %130 : vector<1x128xf32> to vector<64x128xf32>
    %132 = arith.mulf %127, %131 : vector<64x128xf32>
    %cst_118 = arith.constant 0.000000e+00 : f32
    %133 = vector.broadcast %cst_118 : f32 to vector<64x128xf32>
    %134 = arith.cmpf oge, %132, %133 : vector<64x128xf32>
    %cst_119 = arith.constant 2.000000e-01 : f32
    %135 = vector.broadcast %cst_119 : f32 to vector<64x128xf32>
    %136 = arith.mulf %135, %132 : vector<64x128xf32>
    %137 = arith.select %134, %132, %136 : vector<64x128xi1>, vector<64x128xf32>
    %c0_120 = arith.constant 0 : index
    %c0_121 = arith.constant 0 : index
    %c0_122 = arith.constant 0 : index
    %138 = vector.load %arg3[%c0_120, %c0_121, %c0_122] : memref<1x64x128xf32, #tpu.memory_space<vmem>>, vector<1x64x128xf32>
    %139 = vector.shape_cast %138 : vector<1x64x128xf32> to vector<64x128xf32>
    %140 = vector.shape_cast %137 : vector<64x128xf32> to vector<1x64x128xf32>
    tpu.vector_store %arg3[%c0_120, %c0_121, %c0_122], %140 {strides = array<i32>} : memref<1x64x128xf32, #tpu.memory_space<vmem>>, vector<1x64x128xf32>,
    return
  }
  func.func @transform_0(%arg0: i32) -> (i32, i32, i32, i32) {
    %c0_i32 = arith.constant 0 : i32
    %c0_i32_0 = arith.constant 0 : i32
    %c0_i32_1 = arith.constant 0 : i32
    %c0_i32_2 = arith.constant 0 : i32
    return %arg0, %c0_i32, %c0_i32_0, %c0_i32_1 : i32, i32, i32, i32
  }
  func.func @transform_1(%arg0: i32) -> (i32, i32, i32) {
    %c0_i32 = arith.constant 0 : i32
    %c0_i32_0 = arith.constant 0 : i32
    %c0_i32_1 = arith.constant 0 : i32
    %c0_i32_2 = arith.constant 0 : i32
    return %c0_i32, %c0_i32_0, %c0_i32_1 : i32, i32, i32
  }
  func.func @transform_2(%arg0: i32) -> (i32, i32, i32) {
    %c0_i32 = arith.constant 0 : i32
    %c0_i32_0 = arith.constant 0 : i32
    %c0_i32_1 = arith.constant 0 : i32
    return %arg0, %c0_i32, %c0_i32_0 : i32, i32, i32
  }
}

</mosaic_0001>

<llo_original>
// kernel: tpu_custom_call.1
$region0: #{tpu_custom_call.1}
  #allocation0 [shape = 'u32[]', space=smem, size = 0x4, offset = 0x4, fixed_abs, tag = 'smem constant byte address 0x4 - core index']
  #allocation1 [shape = 'u32[72,128]{1,0:T(1,128)}', space=vmem, size = 0x9000, scoped, tag = 'internal scratch']
  %s0 = inlined_call_operand.vmem [shape: bf16[8,9,9,4], index: 0, kind: input, shape index: {}]
  %s1 = inlined_call_operand.vmem [shape: bf16[16,4,128], index: 1, kind: input, shape index: {}]
  %s2 = inlined_call_operand.hbm [shape: f32[2,64,128], index: 2, kind: output, shape index: {}]
  %s3 = sld [smem:[#allocation0]]
  $region41: #{tpu_custom_call.1} parent=0
    _
  %s5 = ssub.s32 1, %s3
  %s6 = scalar_select 0, %s5, %s3
  $region1: #{tpu_custom_call.1} parent=0
    #allocation2 [shape = 'u8[65536]{0}', space=vmem, size = 0x10000, scoped, tag = 'output window, operand 0']
    #allocation3 [shape = 's32[2]{0}', space=sflag, size = 0x8, scoped, tag = 'scoped memory for tpu_custom_call.1']
    %7 = vsyncpa [#allocation3], 0
    %s8 = scalar_lea.sflag [#allocation3], 1
    %9 = vsyncpa %s8, 0
    loop: start=0, step=1, limit=4
    $region2: #{tpu_custom_call.1} parent=1 // loop_pre_header
      _
    $region3: #{tpu_custom_call.1} parent=1 // loop_header
      %s11 = sphi 0, %s15
      %p12 = scmp.ge.s32.totalorder %s11, 4
      %s21 = sphi 0, %s23
      %s24 = sphi 0, %s21
      %s25 = sphi 0, %s24
      %s41 = sphi 0, %s25
      %s45 = sphi 0, %s45
      %s47 = sphi 0, %s45
      %s48 = sphi 0, %s47
      %s62 = sphi 0, %s48
      %s68 = sphi 0, %s70
      %s71 = sphi 0, %s68
      %s72 = sphi 0, %s71
      %s88 = sphi 0, %s72
    $region4: #{tpu_custom_call.1} parent=1 // loop_header_branch
      %14 = sbr.rel (%p12) target = $region8
    $region5: #{tpu_custom_call.1} parent=1 // loop_body
      %s16 = ssub.s32 %s11, 1
      %s17 = ssub.s32 %s11, 2
      %s18 = sadd.s32 %s11, 1
      %s19 = ssub.s32 %s11, %s18
      %p20 = scmp.eq.s32.totalorder %s19, 0
      %s22 = sadd.s32 %s21, 1
      %s23 = scalar_select %p20, %s21, %s22
      %p26 = pneg %p20
      %p27 = scmp.eq.s32.totalorder %s11, 1
      %p28 = por %p26, %p27
      %p29 = scmp.ne.s32.totalorder %s21, %s24
      %p30 = scmp.eq.s32.totalorder %s11, 0
      %p31 = por %p29, %p30
      %p32 = scmp.ne.s32.totalorder %s21, %s24
      %p33 = scmp.eq.s32.totalorder %s16, 1
      %p34 = por %p32, %p33
      %p35 = scmp.ne.s32.totalorder %s24, %s25
      %p36 = scmp.eq.s32.totalorder %s16, 0
      %p37 = por %p35, %p36
      %p38 = scmp.ne.s32.totalorder %s24, %s25
      %p39 = scmp.eq.s32.totalorder %s17, 1
      %p40 = por %p38, %p39
      %p42 = scmp.ne.s32.totalorder %s25, %s41
      %p43 = scmp.eq.s32.totalorder %s17, 0
      %p44 = por %p42, %p43
      %s46 = sadd.s32 %s45, 1
      %p49 = scmp.eq.s32.totalorder %s11, 1
      %p50 = scmp.ne.s32.totalorder %s45, %s47
      %p51 = scmp.eq.s32.totalorder %s11, 0
      %p52 = por %p50, %p51
      %p53 = scmp.ne.s32.totalorder %s45, %s47
      %p54 = scmp.eq.s32.totalorder %s16, 1
      %p55 = por %p53, %p54
      %p56 = scmp.ne.s32.totalorder %s47, %s48
      %p57 = scmp.eq.s32.totalorder %s16, 0
      %p58 = por %p56, %p57
      %p59 = scmp.ne.s32.totalorder %s47, %s48
      %p60 = scmp.eq.s32.totalorder %s17, 1
      %p61 = por %p59, %p60
      %p63 = scmp.ne.s32.totalorder %s48, %s62
      %p64 = scmp.eq.s32.totalorder %s17, 0
      %p65 = por %p63, %p64
      %s66 = ssub.s32 %s11, %s18
      %p67 = scmp.eq.s32.totalorder %s66, 0
      %s69 = sadd.s32 %s68, 1
      %s70 = scalar_select %p67, %s68, %s69
      %p73 = pneg %p67
      %p74 = scmp.eq.s32.totalorder %s11, 1
      %p75 = por %p73, %p74
      %p76 = scmp.ne.s32.totalorder %s68, %s71
      %p77 = scmp.eq.s32.totalorder %s11, 0
      %p78 = por %p76, %p77
      %p79 = scmp.ne.s32.totalorder %s68, %s71
      %p80 = scmp.eq.s32.totalorder %s16, 1
      %p81 = por %p79, %p80
      %p82 = scmp.ne.s32.totalorder %s71, %s72
      %p83 = scmp.eq.s32.totalorder %s16, 0
      %p84 = por %p82, %p83
      %p85 = scmp.ne.s32.totalorder %s71, %s72
      %p86 = scmp.eq.s32.totalorder %s17, 1
      %p87 = por %p85, %p86
      %p89 = scmp.ne.s32.totalorder %s72, %s88
      %p90 = scmp.eq.s32.totalorder %s17, 0
      %p91 = por %p89, %p90
      %p92 = scmp.le.s32.totalorder 1, %s11
      %p93 = scmp.lt.s32.totalorder %s11, 3
      %p94 = pnand %p92, %p93
      %p95 = pneg %p94
      // Predicated region
      $region9: #{tpu_custom_call.1} parent=5 // pred_check
        _
      $region10: #{tpu_custom_call.1} parent=5 // pred_check_branch
        %97 = sbr.rel (%p94) target = $region12
      $region11: #{tpu_custom_call.1} parent=5 // pred_region
        %s98 = ssub.s32 %s11, 1
        // Predicated region
        $region13: #{tpu_custom_call.1} parent=11 // pred_check
          %p99 = pneg %p58
        $region14: #{tpu_custom_call.1} parent=11 // pred_check_branch
          %101 = sbr.rel (%p99) target = $region16
        $region15: #{tpu_custom_call.1} parent=11 // pred_region
          _
        $region16: #{tpu_custom_call.1} parent=11 // pred_fallthru
          _
      $region12: #{tpu_custom_call.1} parent=5 // pred_fallthru
        _
      %p102 = scmp.lt.s32.totalorder %s11, 2
      // Predicated region
      $region17: #{tpu_custom_call.1} parent=5 // pred_check
        %p103 = pneg %p102
      $region18: #{tpu_custom_call.1} parent=5 // pred_check_branch
        %105 = sbr.rel (%p103) target = $region20
      $region19: #{tpu_custom_call.1} parent=5 // pred_region
        // Predicated region
        $region21: #{tpu_custom_call.1} parent=19 // pred_check
          %p106 = pneg %p31
        $region22: #{tpu_custom_call.1} parent=19 // pred_check_branch
          %108 = sbr.rel (%p106) target = $region24
        $region23: #{tpu_custom_call.1} parent=19 // pred_region
          %s109 = smul.u32 4, %s11
          %p110 = scmp.lt.s32.totalorder %s109, 7
          %s111 = scalar_select %p110, %s109, 7
          %s112 = smul.addr %s111, 18
          %s113 = smul.addr %s112, 4
          %s114 = scalar_lea.vmem %s0, %s113
          %s115 = smul.u32 4, %s11
        $region24: #{tpu_custom_call.1} parent=19 // pred_fallthru
          _
      $region20: #{tpu_custom_call.1} parent=5 // pred_fallthru
        _
      %p116 = scmp.le.s32.totalorder 1, %s11
      %p117 = scmp.lt.s32.totalorder %s11, 3
      %p118 = pnand %p116, %p117
      %p119 = pneg %p118
      // Predicated region
      $region25: #{tpu_custom_call.1} parent=5 // pred_check
        _
      $region26: #{tpu_custom_call.1} parent=5 // pred_check_branch
        %121 = sbr.rel (%p118) target = $region28
      $region27: #{tpu_custom_call.1} parent=5 // pred_region
        %s122 = ssub.s32 %s11, 1
        %s123 = smul.u32 4, %s16
        %p124 = scmp.lt.s32.totalorder %s123, 7
        %s125 = scalar_select %p124, %s123, 7
        %s126 = smul.addr %s125, 18
        %s127 = smul.addr %s126, 4
        %s128 = scalar_lea.vmem %s0, %s127
        %p129 = pneg %p37
        %p130 = pneg %p34
        %p131 = pneg %p58
        %p132 = pneg %p55
        %p133 = pneg %p84
        %p134 = pneg %p81
        %s135 = sand.u32 %s71, 1
        %s136 = scalar_lea.sflag [#allocation3], %s135
        %s137 = sand.u32 %s71, 1
        %s138 = smul.addr %s137, 64
        %s139 = scalar_lea.vmem [#allocation2], %s138
        %s140 = smul.u32 4, %s16
        %p141 = scmp.lt.s32.totalorder %s140, 7
        %s142 = scalar_select %p141, %s140, 7
        %s143 = smul.addr %s142, 18
        %s144 = smul.addr %s143, 4
        %s145 = scalar_lea.vmem %s0, %s144
        %s146 = smul.u32 4, %s16
        %v148 = vld [vmem:[%s145] sm:$0xf]
        %v149 = vld [vmem:[%s145 + $0x8] sm:$0xf]
        %v150 = vld [vmem:[%s145 + $0x10] sm:$0xf]
        %v151 = vld [vmem:[%s145 + $0x18] sm:$0xf]
        %v152 = vld [vmem:[%s145 + $0x20] sm:$0xf]
        %v153 = vld [vmem:[%s145 + $0x28] sm:$0xf]
        %v154 = vld [vmem:[%s145 + $0x30] sm:$0xf]
        %v155 = vld [vmem:[%s145 + $0x38] sm:$0xf]
        %v156 = vld [vmem:[%s1] sm:$0x3]
        %s157 = scalar_lea.vmem %s145, 72
        %v158 = vld [vmem:[%s157] sm:$0xf]
        %v159 = vld [vmem:[%s157 + $0x8] sm:$0xf]
        %v160 = vld [vmem:[%s157 + $0x10] sm:$0xf]
        %v161 = vld [vmem:[%s157 + $0x18] sm:$0xf]
        %v162 = vld [vmem:[%s157 + $0x20] sm:$0xf]
        %v163 = vld [vmem:[%s157 + $0x28] sm:$0xf]
        %v164 = vld [vmem:[%s157 + $0x30] sm:$0xf]
        %v165 = vld [vmem:[%s157 + $0x38] sm:$0xf]
        %s166 = scalar_lea.vmem %s1, 2
        %v167 = vld [vmem:[%s166] sm:$0x3]
        %v176 = vunpack.c.l.b16 %v158
        %v177 = vunpack.c.l.b16 %v159
        %v178 = vunpack.c.l.b16 %v160
        %v179 = vunpack.c.l.b16 %v161
        %v180 = vunpack.c.l.b16 %v162
        %v181 = vunpack.c.l.b16 %v163
        %v182 = vunpack.c.l.b16 %v164
        %v183 = vunpack.c.l.b16 %v165
        %v184 = vpack.c.b16 %v177, %v176
        %v185 = vpack.c.b16 %v179, %v178
        %v186 = vpack.c.b16 %v181, %v180
        %v187 = vpack.c.b16 %v183, %v182
        %vm188 = vcmask 31744
        %v190 = vsel %vm188, %v184, 0
        %v193 = vsel %vm188, %v185, 0
        %v196 = vsel %vm188, %v186, 0
        %v199 = vsel %vm188, %v187, 0
        %vm201 = vcmask 1041408
        %v203 = vsel %vm201, %v167, 0
        %205 = vmatpush.bf16.msra.mxu0 0
        %206 = vmatpush.bf16.msra.mxu0 0
        %207 = vmatpush.bf16.msra.mxu0 0
        %208 = vmatpush.bf16.msra.mxu0 0
        %209 = vmatpush.bf16.msra.mxu0 0
        %210 = vmatpush.bf16.msra.mxu0 0
        %211 = vmatpush.bf16.msra.mxu0 0
        %212 = vmatpush.bf16.msra.mxu0 %v203
        %213 = vmatmul.bf16.gmra.mxu0 %v190
        %v214 = vpop.f32.mrf.mxu0
        %v215 = vadd.f32 0.0, %v214
        %v216 = vpop.f32.mrf.mxu0
        %v217 = vadd.f32 0.0, %v216
        %218 = vmatmul.bf16.gmra.mxu0 %v193
        %v219 = vpop.f32.mrf.mxu0
        %v220 = vadd.f32 0.0, %v219
        %v221 = vpop.f32.mrf.mxu0
        %v222 = vadd.f32 0.0, %v221
        %223 = vmatmul.bf16.gmra.mxu0 %v196
        %v224 = vpop.f32.mrf.mxu0
        %v225 = vadd.f32 0.0, %v224
        %v226 = vpop.f32.mrf.mxu0
        %v227 = vadd.f32 0.0, %v226
        %228 = vmatmul.bf16.gmra.mxu0 %v199
        %v229 = vpop.f32.mrf.mxu0
        %v230 = vadd.f32 0.0, %v229
        %v231 = vpop.f32.mrf.mxu0
        %v232 = vadd.f32 0.0, %v231
        %233 = vdwg.mxu0
        %v242 = vunpack.c.l.b16 %v148
        %v243 = vunpack.c.l.b16 %v149
        %v244 = vunpack.c.l.b16 %v150
        %v245 = vunpack.c.l.b16 %v151
        %v246 = vunpack.c.l.b16 %v152
        %v247 = vunpack.c.l.b16 %v153
        %v248 = vunpack.c.l.b16 %v154
        %v249 = vunpack.c.l.b16 %v155
        %v250 = vpack.c.b16 %v243, %v242
        %v251 = vpack.c.b16 %v245, %v244
        %v252 = vpack.c.b16 %v247, %v246
        %v253 = vpack.c.b16 %v249, %v248
        %v255 = vsel %vm188, %v250, 0
        %v258 = vsel %vm188, %v251, 0
        %v261 = vsel %vm188, %v252, 0
        %v264 = vsel %vm188, %v253, 0
        %v267 = vsel %vm201, %v156, 0
        %269 = vmatpush.bf16.msra.mxu0 0
        %270 = vmatpush.bf16.msra.mxu0 0
        %271 = vmatpush.bf16.msra.mxu0 0
        %272 = vmatpush.bf16.msra.mxu0 0
        %273 = vmatpush.bf16.msra.mxu0 0
        %274 = vmatpush.bf16.msra.mxu0 0
        %275 = vmatpush.bf16.msra.mxu0 0
        %276 = vmatpush.bf16.msra.mxu0 %v267
        %277 = vmatmul.bf16.gmra.mxu0 %v255
        %v278 = vpop.f32.mrf.mxu0
        %v279 = vadd.f32 %v215, %v278
        %v280 = vpop.f32.mrf.mxu0
        %v281 = vadd.f32 %v217, %v280
        %282 = vmatmul.bf16.gmra.mxu0 %v258
        %v283 = vpop.f32.mrf.mxu0
        %v284 = vadd.f32 %v220, %v283
        %v285 = vpop.f32.mrf.mxu0
        %v286 = vadd.f32 %v222, %v285
        %287 = vmatmul.bf16.gmra.mxu0 %v261
        %v288 = vpop.f32.mrf.mxu0
        %v289 = vadd.f32 %v225, %v288
        %v290 = vpop.f32.mrf.mxu0
        %v291 = vadd.f32 %v227, %v290
        %292 = vmatmul.bf16.gmra.mxu0 %v264
        %v293 = vpop.f32.mrf.mxu0
        %v294 = vadd.f32 %v230, %v293
        %v295 = vpop.f32.mrf.mxu0
        %v296 = vadd.f32 %v232, %v295
        %297 = vdwg.mxu0
        %v298 = vld [vmem:[%s145] sm:$0xf]
        %v299 = vld [vmem:[%s145 + $0x4] sm:$0x1]
        %v300 = vld [vmem:[%s145 + $0x8] sm:$0xf]
        %v301 = vld [vmem:[%s145 + $0xc] sm:$0x1]
        %v302 = vld [vmem:[%s145 + $0x10] sm:$0xf]
        %v303 = vld [vmem:[%s145 + $0x14] sm:$0x1]
        %v304 = vld [vmem:[%s145 + $0x18] sm:$0xf]
        %v305 = vld [vmem:[%s145 + $0x1c] sm:$0x1]
        %v306 = vld [vmem:[%s145 + $0x20] sm:$0xf]
        %v307 = vld [vmem:[%s145 + $0x24] sm:$0x1]
        %v308 = vld [vmem:[%s145 + $0x28] sm:$0xf]
        %v309 = vld [vmem:[%s145 + $0x2c] sm:$0x1]
        %v310 = vld [vmem:[%s145 + $0x30] sm:$0xf]
        %v311 = vld [vmem:[%s145 + $0x34] sm:$0x1]
        %v312 = vld [vmem:[%s145 + $0x38] sm:$0xf]
        %v313 = vld [vmem:[%s145 + $0x3c] sm:$0x1]
        %vm314 = vsmask.f32 3328
        %vm315 = vsmask.f32 7440
        %vm316 = vmor %vm314, %vm315
        %v318 = vshrl.u32 %v298, 16
        %v320 = vrot.slane %v318, 4
        %v321 = vshll.u32 %v298, 16
        %v323 = vrot.slane %v321, 5
        %v324 = vor.u32 %v320, %v323
        %v325 = vrot.slane %v324, 4
        %v327 = vshll.u32 %v299, 16
        %v329 = vrot.slane %v327, 5
        %v330 = vsel %vm316, %v325, %v329
        %v332 = vshrl.u32 %v300, 16
        %v334 = vrot.slane %v332, 4
        %v335 = vshll.u32 %v300, 16
        %v337 = vrot.slane %v335, 5
        %v338 = vor.u32 %v334, %v337
        %v339 = vrot.slane %v338, 4
        %v341 = vshll.u32 %v301, 16
        %v343 = vrot.slane %v341, 5
        %v344 = vsel %vm316, %v339, %v343
        %v346 = vshrl.u32 %v302, 16
        %v348 = vrot.slane %v346, 4
        %v349 = vshll.u32 %v302, 16
        %v351 = vrot.slane %v349, 5
        %v352 = vor.u32 %v348, %v351
        %v353 = vrot.slane %v352, 4
        %v355 = vshll.u32 %v303, 16
        %v357 = vrot.slane %v355, 5
        %v358 = vsel %vm316, %v353, %v357
        %v360 = vshrl.u32 %v304, 16
        %v362 = vrot.slane %v360, 4
        %v363 = vshll.u32 %v304, 16
        %v365 = vrot.slane %v363, 5
        %v366 = vor.u32 %v362, %v365
        %v367 = vrot.slane %v366, 4
        %v369 = vshll.u32 %v305, 16
        %v371 = vrot.slane %v369, 5
        %v372 = vsel %vm316, %v367, %v371
        %v374 = vshrl.u32 %v306, 16
        %v376 = vrot.slane %v374, 4
        %v377 = vshll.u32 %v306, 16
        %v379 = vrot.slane %v377, 5
        %v380 = vor.u32 %v376, %v379
        %v381 = vrot.slane %v380, 4
        %v383 = vshll.u32 %v307, 16
        %v385 = vrot.slane %v383, 5
        %v386 = vsel %vm316, %v381, %v385
        %v388 = vshrl.u32 %v308, 16
        %v390 = vrot.slane %v388, 4
        %v391 = vshll.u32 %v308, 16
        %v393 = vrot.slane %v391, 5
        %v394 = vor.u32 %v390, %v393
        %v395 = vrot.slane %v394, 4
        %v397 = vshll.u32 %v309, 16
        %v399 = vrot.slane %v397, 5
        %v400 = vsel %vm316, %v395, %v399
        %v402 = vshrl.u32 %v310, 16
        %v404 = vrot.slane %v402, 4
        %v405 = vshll.u32 %v310, 16
        %v407 = vrot.slane %v405, 5
        %v408 = vor.u32 %v404, %v407
        %v409 = vrot.slane %v408, 4
        %v411 = vshll.u32 %v311, 16
        %v413 = vrot.slane %v411, 5
        %v414 = vsel %vm316, %v409, %v413
        %v416 = vshrl.u32 %v312, 16
        %v418 = vrot.slane %v416, 4
        %v419 = vshll.u32 %v312, 16
        %v421 = vrot.slane %v419, 5
        %v422 = vor.u32 %v418, %v421
        %v423 = vrot.slane %v422, 4
        %v425 = vshll.u32 %v313, 16
        %v427 = vrot.slane %v425, 5
        %v428 = vsel %vm316, %v423, %v427
        %s429 = scalar_lea.vmem %s1, 4
        %v430 = vld [vmem:[%s429] sm:$0x3]
        %v431 = vunpack.c.l.b16 %v330
        %v432 = vunpack.c.l.b16 %v344
        %v433 = vunpack.c.l.b16 %v358
        %v434 = vunpack.c.l.b16 %v372
        %v435 = vunpack.c.l.b16 %v386
        %v436 = vunpack.c.l.b16 %v400
        %v437 = vunpack.c.l.b16 %v414
        %v438 = vunpack.c.l.b16 %v428
        %v439 = vpack.c.b16 %v432, %v431
        %v440 = vpack.c.b16 %v434, %v433
        %v441 = vpack.c.b16 %v436, %v435
        %v442 = vpack.c.b16 %v438, %v437
        %v444 = vsel %vm188, %v439, 0
        %v447 = vsel %vm188, %v440, 0
        %v450 = vsel %vm188, %v441, 0
        %v453 = vsel %vm188, %v442, 0
        %v456 = vsel %vm201, %v430, 0
        %458 = vmatpush.bf16.msra.mxu0 0
        %459 = vmatpush.bf16.msra.mxu0 0
        %460 = vmatpush.bf16.msra.mxu0 0
        %461 = vmatpush.bf16.msra.mxu0 0
        %462 = vmatpush.bf16.msra.mxu0 0
        %463 = vmatpush.bf16.msra.mxu0 0
        %464 = vmatpush.bf16.msra.mxu0 0
        %465 = vmatpush.bf16.msra.mxu0 %v456
        %466 = vmatmul.bf16.gmra.mxu0 %v444
        %v467 = vpop.f32.mrf.mxu0
        %v468 = vadd.f32 0.0, %v467
        %v469 = vpop.f32.mrf.mxu0
        %v470 = vadd.f32 0.0, %v469
        %471 = vmatmul.bf16.gmra.mxu0 %v447
        %v472 = vpop.f32.mrf.mxu0
        %v473 = vadd.f32 0.0, %v472
        %v474 = vpop.f32.mrf.mxu0
        %v475 = vadd.f32 0.0, %v474
        %476 = vmatmul.bf16.gmra.mxu0 %v450
        %v477 = vpop.f32.mrf.mxu0
        %v478 = vadd.f32 0.0, %v477
        %v479 = vpop.f32.mrf.mxu0
        %v480 = vadd.f32 0.0, %v479
        %481 = vmatmul.bf16.gmra.mxu0 %v453
        %v482 = vpop.f32.mrf.mxu0
        %v483 = vadd.f32 0.0, %v482
        %v484 = vpop.f32.mrf.mxu0
        %v485 = vadd.f32 0.0, %v484
        %486 = vdwg.mxu0
        %v487 = vadd.f32 %v279, %v468
        %v488 = vadd.f32 %v281, %v470
        %v489 = vadd.f32 %v284, %v473
        %v490 = vadd.f32 %v286, %v475
        %v491 = vadd.f32 %v289, %v478
        %v492 = vadd.f32 %v291, %v480
        %v493 = vadd.f32 %v294, %v483
        %v494 = vadd.f32 %v296, %v485
        %v495 = vld [vmem:[%s157] sm:$0xf]
        %v496 = vld [vmem:[%s157 + $0x4] sm:$0x1]
        %v497 = vld [vmem:[%s157 + $0x8] sm:$0xf]
        %v498 = vld [vmem:[%s157 + $0xc] sm:$0x1]
        %v499 = vld [vmem:[%s157 + $0x10] sm:$0xf]
        %v500 = vld [vmem:[%s157 + $0x14] sm:$0x1]
        %v501 = vld [vmem:[%s157 + $0x18] sm:$0xf]
        %v502 = vld [vmem:[%s157 + $0x1c] sm:$0x1]
        %v503 = vld [vmem:[%s157 + $0x20] sm:$0xf]
        %v504 = vld [vmem:[%s157 + $0x24] sm:$0x1]
        %v505 = vld [vmem:[%s157 + $0x28] sm:$0xf]
        %v506 = vld [vmem:[%s157 + $0x2c] sm:$0x1]
        %v507 = vld [vmem:[%s157 + $0x30] sm:$0xf]
        %v508 = vld [vmem:[%s157 + $0x34] sm:$0x1]
        %v509 = vld [vmem:[%s157 + $0x38] sm:$0xf]
        %v510 = vld [vmem:[%s157 + $0x3c] sm:$0x1]
        %v512 = vshrl.u32 %v495, 16
        %v514 = vrot.slane %v512, 4
        %v515 = vshll.u32 %v495, 16
        %v517 = vrot.slane %v515, 5
        %v518 = vor.u32 %v514, %v517
        %v519 = vrot.slane %v518, 4
        %v521 = vshll.u32 %v496, 16
        %v523 = vrot.slane %v521, 5
        %v524 = vsel %vm316, %v519, %v523
        %v526 = vshrl.u32 %v497, 16
        %v528 = vrot.slane %v526, 4
        %v529 = vshll.u32 %v497, 16
        %v531 = vrot.slane %v529, 5
        %v532 = vor.u32 %v528, %v531
        %v533 = vrot.slane %v532, 4
        %v535 = vshll.u32 %v498, 16
        %v537 = vrot.slane %v535, 5
        %v538 = vsel %vm316, %v533, %v537
        %v540 = vshrl.u32 %v499, 16
        %v542 = vrot.slane %v540, 4
        %v543 = vshll.u32 %v499, 16
        %v545 = vrot.slane %v543, 5
        %v546 = vor.u32 %v542, %v545
        %v547 = vrot.slane %v546, 4
        %v549 = vshll.u32 %v500, 16
        %v551 = vrot.slane %v549, 5
        %v552 = vsel %vm316, %v547, %v551
        %v554 = vshrl.u32 %v501, 16
        %v556 = vrot.slane %v554, 4
        %v557 = vshll.u32 %v501, 16
        %v559 = vrot.slane %v557, 5
        %v560 = vor.u32 %v556, %v559
        %v561 = vrot.slane %v560, 4
        %v563 = vshll.u32 %v502, 16
        %v565 = vrot.slane %v563, 5
        %v566 = vsel %vm316, %v561, %v565
        %v568 = vshrl.u32 %v503, 16
        %v570 = vrot.slane %v568, 4
        %v571 = vshll.u32 %v503, 16
        %v573 = vrot.slane %v571, 5
        %v574 = vor.u32 %v570, %v573
        %v575 = vrot.slane %v574, 4
        %v577 = vshll.u32 %v504, 16
        %v579 = vrot.slane %v577, 5
        %v580 = vsel %vm316, %v575, %v579
        %v582 = vshrl.u32 %v505, 16
        %v584 = vrot.slane %v582, 4
        %v585 = vshll.u32 %v505, 16
        %v587 = vrot.slane %v585, 5
        %v588 = vor.u32 %v584, %v587
        %v589 = vrot.slane %v588, 4
        %v591 = vshll.u32 %v506, 16
        %v593 = vrot.slane %v591, 5
        %v594 = vsel %vm316, %v589, %v593
        %v596 = vshrl.u32 %v507, 16
        %v598 = vrot.slane %v596, 4
        %v599 = vshll.u32 %v507, 16
        %v601 = vrot.slane %v599, 5
        %v602 = vor.u32 %v598, %v601
        %v603 = vrot.slane %v602, 4
        %v605 = vshll.u32 %v508, 16
        %v607 = vrot.slane %v605, 5
        %v608 = vsel %vm316, %v603, %v607
        %v610 = vshrl.u32 %v509, 16
        %v612 = vrot.slane %v610, 4
        %v613 = vshll.u32 %v509, 16
        %v615 = vrot.slane %v613, 5
        %v616 = vor.u32 %v612, %v615
        %v617 = vrot.slane %v616, 4
        %v619 = vshll.u32 %v510, 16
        %v621 = vrot.slane %v619, 5
        %v622 = vsel %vm316, %v617, %v621
        %s623 = scalar_lea.vmem %s1, 6
        %v624 = vld [vmem:[%s623] sm:$0x3]
        %v625 = vunpack.c.l.b16 %v524
        %v626 = vunpack.c.l.b16 %v538
        %v627 = vunpack.c.l.b16 %v552
        %v628 = vunpack.c.l.b16 %v566
        %v629 = vunpack.c.l.b16 %v580
        %v630 = vunpack.c.l.b16 %v594
        %v631 = vunpack.c.l.b16 %v608
        %v632 = vunpack.c.l.b16 %v622
        %v633 = vpack.c.b16 %v626, %v625
        %v634 = vpack.c.b16 %v628, %v627
        %v635 = vpack.c.b16 %v630, %v629
        %v636 = vpack.c.b16 %v632, %v631
        %v638 = vsel %vm188, %v633, 0
        %v641 = vsel %vm188, %v634, 0
        %v644 = vsel %vm188, %v635, 0
        %v647 = vsel %vm188, %v636, 0
        %v650 = vsel %vm201, %v624, 0
        %652 = vmatpush.bf16.msra.mxu0 0
        %653 = vmatpush.bf16.msra.mxu0 0
        %654 = vmatpush.bf16.msra.mxu0 0
        %655 = vmatpush.bf16.msra.mxu0 0
        %656 = vmatpush.bf16.msra.mxu0 0
        %657 = vmatpush.bf16.msra.mxu0 0
        %658 = vmatpush.bf16.msra.mxu0 0
        %659 = vmatpush.bf16.msra.mxu0 %v650
        %660 = vmatmul.bf16.gmra.mxu0 %v638
        %v661 = vpop.f32.mrf.mxu0
        %v662 = vadd.f32 0.0, %v661
        %v663 = vpop.f32.mrf.mxu0
        %v664 = vadd.f32 0.0, %v663
        %665 = vmatmul.bf16.gmra.mxu0 %v641
        %v666 = vpop.f32.mrf.mxu0
        %v667 = vadd.f32 0.0, %v666
        %v668 = vpop.f32.mrf.mxu0
        %v669 = vadd.f32 0.0, %v668
        %670 = vmatmul.bf16.gmra.mxu0 %v644
        %v671 = vpop.f32.mrf.mxu0
        %v672 = vadd.f32 0.0, %v671
        %v673 = vpop.f32.mrf.mxu0
        %v674 = vadd.f32 0.0, %v673
        %675 = vmatmul.bf16.gmra.mxu0 %v647
        %v676 = vpop.f32.mrf.mxu0
        %v677 = vadd.f32 0.0, %v676
        %v678 = vpop.f32.mrf.mxu0
        %v679 = vadd.f32 0.0, %v678
        %680 = vdwg.mxu0
        %v681 = vadd.f32 %v487, %v662
        %v682 = vadd.f32 %v488, %v664
        %v683 = vadd.f32 %v489, %v667
        %v684 = vadd.f32 %v490, %v669
        %v685 = vadd.f32 %v491, %v672
        %v686 = vadd.f32 %v492, %v674
        %v687 = vadd.f32 %v493, %v677
        %v688 = vadd.f32 %v494, %v679
        %s689 = scalar_lea.vmem %s145, 144
        %v690 = vld [vmem:[%s689] sm:$0xf]
        %v691 = vld [vmem:[%s689 + $0x8] sm:$0xf]
        %v692 = vld [vmem:[%s689 + $0x10] sm:$0xf]
        %v693 = vld [vmem:[%s689 + $0x18] sm:$0xf]
        %v694 = vld [vmem:[%s689 + $0x20] sm:$0xf]
        %v695 = vld [vmem:[%s689 + $0x28] sm:$0xf]
        %v696 = vld [vmem:[%s689 + $0x30] sm:$0xf]
        %v697 = vld [vmem:[%s689 + $0x38] sm:$0xf]
        %s698 = scalar_lea.vmem %s1, 8
        %v699 = vld [vmem:[%s698] sm:$0x3]
        %v708 = vunpack.c.l.b16 %v690
        %v709 = vunpack.c.l.b16 %v691
        %v710 = vunpack.c.l.b16 %v692
        %v711 = vunpack.c.l.b16 %v693
        %v712 = vunpack.c.l.b16 %v694
        %v713 = vunpack.c.l.b16 %v695
        %v714 = vunpack.c.l.b16 %v696
        %v715 = vunpack.c.l.b16 %v697
        %v716 = vpack.c.b16 %v709, %v708
        %v717 = vpack.c.b16 %v711, %v710
        %v718 = vpack.c.b16 %v713, %v712
        %v719 = vpack.c.b16 %v715, %v714
        %v721 = vsel %vm188, %v716, 0
        %v724 = vsel %vm188, %v717, 0
        %v727 = vsel %vm188, %v718, 0
        %v730 = vsel %vm188, %v719, 0
        %v733 = vsel %vm201, %v699, 0
        %735 = vmatpush.bf16.msra.mxu0 0
        %736 = vmatpush.bf16.msra.mxu0 0
        %737 = vmatpush.bf16.msra.mxu0 0
        %738 = vmatpush.bf16.msra.mxu0 0
        %739 = vmatpush.bf16.msra.mxu0 0
        %740 = vmatpush.bf16.msra.mxu0 0
        %741 = vmatpush.bf16.msra.mxu0 0
        %742 = vmatpush.bf16.msra.mxu0 %v733
        %743 = vmatmul.bf16.gmra.mxu0 %v721
        %v744 = vpop.f32.mrf.mxu0
        %v745 = vadd.f32 0.0, %v744
        %v746 = vpop.f32.mrf.mxu0
        %v747 = vadd.f32 0.0, %v746
        %748 = vmatmul.bf16.gmra.mxu0 %v724
        %v749 = vpop.f32.mrf.mxu0
        %v750 = vadd.f32 0.0, %v749
        %v751 = vpop.f32.mrf.mxu0
        %v752 = vadd.f32 0.0, %v751
        %753 = vmatmul.bf16.gmra.mxu0 %v727
        %v754 = vpop.f32.mrf.mxu0
        %v755 = vadd.f32 0.0, %v754
        %v756 = vpop.f32.mrf.mxu0
        %v757 = vadd.f32 0.0, %v756
        %758 = vmatmul.bf16.gmra.mxu0 %v730
        %v759 = vpop.f32.mrf.mxu0
        %v760 = vadd.f32 0.0, %v759
        %v761 = vpop.f32.mrf.mxu0
        %v762 = vadd.f32 0.0, %v761
        %763 = vdwg.mxu0
        %v764 = vadd.f32 %v681, %v745
        %v765 = vadd.f32 %v682, %v747
        %v766 = vadd.f32 %v683, %v750
        %v767 = vadd.f32 %v684, %v752
        %v768 = vadd.f32 %v685, %v755
        %v769 = vadd.f32 %v686, %v757
        %v770 = vadd.f32 %v687, %v760
        %v771 = vadd.f32 %v688, %v762
        %s772 = scalar_lea.vmem %s145, 216
        %v773 = vld [vmem:[%s772] sm:$0xf]
        %v774 = vld [vmem:[%s772 + $0x8] sm:$0xf]
        %v775 = vld [vmem:[%s772 + $0x10] sm:$0xf]
        %v776 = vld [vmem:[%s772 + $0x18] sm:$0xf]
        %v777 = vld [vmem:[%s772 + $0x20] sm:$0xf]
        %v778 = vld [vmem:[%s772 + $0x28] sm:$0xf]
        %v779 = vld [vmem:[%s772 + $0x30] sm:$0xf]
        %v780 = vld [vmem:[%s772 + $0x38] sm:$0xf]
        %s781 = scalar_lea.vmem %s1, 10
        %v782 = vld [vmem:[%s781] sm:$0x3]
        %v791 = vunpack.c.l.b16 %v773
        %v792 = vunpack.c.l.b16 %v774
        %v793 = vunpack.c.l.b16 %v775
        %v794 = vunpack.c.l.b16 %v776
        %v795 = vunpack.c.l.b16 %v777
        %v796 = vunpack.c.l.b16 %v778
        %v797 = vunpack.c.l.b16 %v779
        %v798 = vunpack.c.l.b16 %v780
        %v799 = vpack.c.b16 %v792, %v791
        %v800 = vpack.c.b16 %v794, %v793
        %v801 = vpack.c.b16 %v796, %v795
        %v802 = vpack.c.b16 %v798, %v797
        %v804 = vsel %vm188, %v799, 0
        %v807 = vsel %vm188, %v800, 0
        %v810 = vsel %vm188, %v801, 0
        %v813 = vsel %vm188, %v802, 0
        %v816 = vsel %vm201, %v782, 0
        %818 = vmatpush.bf16.msra.mxu0 0
        %819 = vmatpush.bf16.msra.mxu0 0
        %820 = vmatpush.bf16.msra.mxu0 0
        %821 = vmatpush.bf16.msra.mxu0 0
        %822 = vmatpush.bf16.msra.mxu0 0
        %823 = vmatpush.bf16.msra.mxu0 0
        %824 = vmatpush.bf16.msra.mxu0 0
        %825 = vmatpush.bf16.msra.mxu0 %v816
        %826 = vmatmul.bf16.gmra.mxu0 %v804
        %v827 = vpop.f32.mrf.mxu0
        %v828 = vadd.f32 0.0, %v827
        %v829 = vpop.f32.mrf.mxu0
        %v830 = vadd.f32 0.0, %v829
        %831 = vmatmul.bf16.gmra.mxu0 %v807
        %v832 = vpop.f32.mrf.mxu0
        %v833 = vadd.f32 0.0, %v832
        %v834 = vpop.f32.mrf.mxu0
        %v835 = vadd.f32 0.0, %v834
        %836 = vmatmul.bf16.gmra.mxu0 %v810
        %v837 = vpop.f32.mrf.mxu0
        %v838 = vadd.f32 0.0, %v837
        %v839 = vpop.f32.mrf.mxu0
        %v840 = vadd.f32 0.0, %v839
        %841 = vmatmul.bf16.gmra.mxu0 %v813
        %v842 = vpop.f32.mrf.mxu0
        %v843 = vadd.f32 0.0, %v842
        %v844 = vpop.f32.mrf.mxu0
        %v845 = vadd.f32 0.0, %v844
        %846 = vdwg.mxu0
        %v847 = vadd.f32 %v764, %v828
        %v848 = vadd.f32 %v765, %v830
        %v849 = vadd.f32 %v766, %v833
        %v850 = vadd.f32 %v767, %v835
        %v851 = vadd.f32 %v768, %v838
        %v852 = vadd.f32 %v769, %v840
        %v853 = vadd.f32 %v770, %v843
        %v854 = vadd.f32 %v771, %v845
        %v855 = vld [vmem:[%s689] sm:$0xf]
        %v856 = vld [vmem:[%s689 + $0x4] sm:$0x1]
        %v857 = vld [vmem:[%s689 + $0x8] sm:$0xf]
        %v858 = vld [vmem:[%s689 + $0xc] sm:$0x1]
        %v859 = vld [vmem:[%s689 + $0x10] sm:$0xf]
        %v860 = vld [vmem:[%s689 + $0x14] sm:$0x1]
        %v861 = vld [vmem:[%s689 + $0x18] sm:$0xf]
        %v862 = vld [vmem:[%s689 + $0x1c] sm:$0x1]
        %v863 = vld [vmem:[%s689 + $0x20] sm:$0xf]
        %v864 = vld [vmem:[%s689 + $0x24] sm:$0x1]
        %v865 = vld [vmem:[%s689 + $0x28] sm:$0xf]
        %v866 = vld [vmem:[%s689 + $0x2c] sm:$0x1]
        %v867 = vld [vmem:[%s689 + $0x30] sm:$0xf]
        %v868 = vld [vmem:[%s689 + $0x34] sm:$0x1]
        %v869 = vld [vmem:[%s689 + $0x38] sm:$0xf]
        %v870 = vld [vmem:[%s689 + $0x3c] sm:$0x1]
        %v872 = vshrl.u32 %v855, 16
        %v874 = vrot.slane %v872, 4
        %v875 = vshll.u32 %v855, 16
        %v877 = vrot.slane %v875, 5
        %v878 = vor.u32 %v874, %v877
        %v879 = vrot.slane %v878, 4
        %v881 = vshll.u32 %v856, 16
        %v883 = vrot.slane %v881, 5
        %v884 = vsel %vm316, %v879, %v883
        %v886 = vshrl.u32 %v857, 16
        %v888 = vrot.slane %v886, 4
        %v889 = vshll.u32 %v857, 16
        %v891 = vrot.slane %v889, 5
        %v892 = vor.u32 %v888, %v891
        %v893 = vrot.slane %v892, 4
        %v895 = vshll.u32 %v858, 16
        %v897 = vrot.slane %v895, 5
        %v898 = vsel %vm316, %v893, %v897
        %v900 = vshrl.u32 %v859, 16
        %v902 = vrot.slane %v900, 4
        %v903 = vshll.u32 %v859, 16
        %v905 = vrot.slane %v903, 5
        %v906 = vor.u32 %v902, %v905
        %v907 = vrot.slane %v906, 4
        %v909 = vshll.u32 %v860, 16
        %v911 = vrot.slane %v909, 5
        %v912 = vsel %vm316, %v907, %v911
        %v914 = vshrl.u32 %v861, 16
        %v916 = vrot.slane %v914, 4
        %v917 = vshll.u32 %v861, 16
        %v919 = vrot.slane %v917, 5
        %v920 = vor.u32 %v916, %v919
        %v921 = vrot.slane %v920, 4
        %v923 = vshll.u32 %v862, 16
        %v925 = vrot.slane %v923, 5
        %v926 = vsel %vm316, %v921, %v925
        %v928 = vshrl.u32 %v863, 16
        %v930 = vrot.slane %v928, 4
        %v931 = vshll.u32 %v863, 16
        %v933 = vrot.slane %v931, 5
        %v934 = vor.u32 %v930, %v933
        %v935 = vrot.slane %v934, 4
        %v937 = vshll.u32 %v864, 16
        %v939 = vrot.slane %v937, 5
        %v940 = vsel %vm316, %v935, %v939
        %v942 = vshrl.u32 %v865, 16
        %v944 = vrot.slane %v942, 4
        %v945 = vshll.u32 %v865, 16
        %v947 = vrot.slane %v945, 5
        %v948 = vor.u32 %v944, %v947
        %v949 = vrot.slane %v948, 4
        %v951 = vshll.u32 %v866, 16
        %v953 = vrot.slane %v951, 5
        %v954 = vsel %vm316, %v949, %v953
        %v956 = vshrl.u32 %v867, 16
        %v958 = vrot.slane %v956, 4
        %v959 = vshll.u32 %v867, 16
        %v961 = vrot.slane %v959, 5
        %v962 = vor.u32 %v958, %v961
        %v963 = vrot.slane %v962, 4
        %v965 = vshll.u32 %v868, 16
        %v967 = vrot.slane %v965, 5
        %v968 = vsel %vm316, %v963, %v967
        %v970 = vshrl.u32 %v869, 16
        %v972 = vrot.slane %v970, 4
        %v973 = vshll.u32 %v869, 16
        %v975 = vrot.slane %v973, 5
        %v976 = vor.u32 %v972, %v975
        %v977 = vrot.slane %v976, 4
        %v979 = vshll.u32 %v870, 16
        %v981 = vrot.slane %v979, 5
        %v982 = vsel %vm316, %v977, %v981
        %s983 = scalar_lea.vmem %s1, 12
        %v984 = vld [vmem:[%s983] sm:$0x3]
        %v985 = vunpack.c.l.b16 %v884
        %v986 = vunpack.c.l.b16 %v898
        %v987 = vunpack.c.l.b16 %v912
        %v988 = vunpack.c.l.b16 %v926
        %v989 = vunpack.c.l.b16 %v940
        %v990 = vunpack.c.l.b16 %v954
        %v991 = vunpack.c.l.b16 %v968
        %v992 = vunpack.c.l.b16 %v982
        %v993 = vpack.c.b16 %v986, %v985
        %v994 = vpack.c.b16 %v988, %v987
        %v995 = vpack.c.b16 %v990, %v989
        %v996 = vpack.c.b16 %v992, %v991
        %v998 = vsel %vm188, %v993, 0
        %v1001 = vsel %vm188, %v994, 0
        %v1004 = vsel %vm188, %v995, 0
        %v1007 = vsel %vm188, %v996, 0
        %v1010 = vsel %vm201, %v984, 0
        %1012 = vmatpush.bf16.msra.mxu0 0
        %1013 = vmatpush.bf16.msra.mxu0 0
        %1014 = vmatpush.bf16.msra.mxu0 0
        %1015 = vmatpush.bf16.msra.mxu0 0
        %1016 = vmatpush.bf16.msra.mxu0 0
        %1017 = vmatpush.bf16.msra.mxu0 0
        %1018 = vmatpush.bf16.msra.mxu0 0
        %1019 = vmatpush.bf16.msra.mxu0 %v1010
        %1020 = vmatmul.bf16.gmra.mxu0 %v998
        %v1021 = vpop.f32.mrf.mxu0
        %v1022 = vadd.f32 0.0, %v1021
        %v1023 = vpop.f32.mrf.mxu0
        %v1024 = vadd.f32 0.0, %v1023
        %1025 = vmatmul.bf16.gmra.mxu0 %v1001
        %v1026 = vpop.f32.mrf.mxu0
        %v1027 = vadd.f32 0.0, %v1026
        %v1028 = vpop.f32.mrf.mxu0
        %v1029 = vadd.f32 0.0, %v1028
        %1030 = vmatmul.bf16.gmra.mxu0 %v1004
        %v1031 = vpop.f32.mrf.mxu0
        %v1032 = vadd.f32 0.0, %v1031
        %v1033 = vpop.f32.mrf.mxu0
        %v1034 = vadd.f32 0.0, %v1033
        %1035 = vmatmul.bf16.gmra.mxu0 %v1007
        %v1036 = vpop.f32.mrf.mxu0
        %v1037 = vadd.f32 0.0, %v1036
        %v1038 = vpop.f32.mrf.mxu0
        %v1039 = vadd.f32 0.0, %v1038
        %1040 = vdwg.mxu0
        %v1041 = vadd.f32 %v847, %v1022
        %v1042 = vadd.f32 %v848, %v1024
        %v1043 = vadd.f32 %v849, %v1027
        %v1044 = vadd.f32 %v850, %v1029
        %v1045 = vadd.f32 %v851, %v1032
        %v1046 = vadd.f32 %v852, %v1034
        %v1047 = vadd.f32 %v853, %v1037
        %v1048 = vadd.f32 %v854, %v1039
        %v1049 = vld [vmem:[%s772] sm:$0xf]
        %v1050 = vld [vmem:[%s772 + $0x4] sm:$0x1]
        %v1051 = vld [vmem:[%s772 + $0x8] sm:$0xf]
        %v1052 = vld [vmem:[%s772 + $0xc] sm:$0x1]
        %v1053 = vld [vmem:[%s772 + $0x10] sm:$0xf]
        %v1054 = vld [vmem:[%s772 + $0x14] sm:$0x1]
        %v1055 = vld [vmem:[%s772 + $0x18] sm:$0xf]
        %v1056 = vld [vmem:[%s772 + $0x1c] sm:$0x1]
        %v1057 = vld [vmem:[%s772 + $0x20] sm:$0xf]
        %v1058 = vld [vmem:[%s772 + $0x24] sm:$0x1]
        %v1059 = vld [vmem:[%s772 + $0x28] sm:$0xf]
        %v1060 = vld [vmem:[%s772 + $0x2c] sm:$0x1]
        %v1061 = vld [vmem:[%s772 + $0x30] sm:$0xf]
        %v1062 = vld [vmem:[%s772 + $0x34] sm:$0x1]
        %v1063 = vld [vmem:[%s772 + $0x38] sm:$0xf]
        %v1064 = vld [vmem:[%s772 + $0x3c] sm:$0x1]
        %v1066 = vshrl.u32 %v1049, 16
        %v1068 = vrot.slane %v1066, 4
        %v1069 = vshll.u32 %v1049, 16
        %v1071 = vrot.slane %v1069, 5
        %v1072 = vor.u32 %v1068, %v1071
        %v1073 = vrot.slane %v1072, 4
        %v1075 = vshll.u32 %v1050, 16
        %v1077 = vrot.slane %v1075, 5
        %v1078 = vsel %vm316, %v1073, %v1077
        %v1080 = vshrl.u32 %v1051, 16
        %v1082 = vrot.slane %v1080, 4
        %v1083 = vshll.u32 %v1051, 16
        %v1085 = vrot.slane %v1083, 5
        %v1086 = vor.u32 %v1082, %v1085
        %v1087 = vrot.slane %v1086, 4
        %v1089 = vshll.u32 %v1052, 16
        %v1091 = vrot.slane %v1089, 5
        %v1092 = vsel %vm316, %v1087, %v1091
        %v1094 = vshrl.u32 %v1053, 16
        %v1096 = vrot.slane %v1094, 4
        %v1097 = vshll.u32 %v1053, 16
        %v1099 = vrot.slane %v1097, 5
        %v1100 = vor.u32 %v1096, %v1099
        %v1101 = vrot.slane %v1100, 4
        %v1103 = vshll.u32 %v1054, 16
        %v1105 = vrot.slane %v1103, 5
        %v1106 = vsel %vm316, %v1101, %v1105
        %v1108 = vshrl.u32 %v1055, 16
        %v1110 = vrot.slane %v1108, 4
        %v1111 = vshll.u32 %v1055, 16
        %v1113 = vrot.slane %v1111, 5
        %v1114 = vor.u32 %v1110, %v1113
        %v1115 = vrot.slane %v1114, 4
        %v1117 = vshll.u32 %v1056, 16
        %v1119 = vrot.slane %v1117, 5
        %v1120 = vsel %vm316, %v1115, %v1119
        %v1122 = vshrl.u32 %v1057, 16
        %v1124 = vrot.slane %v1122, 4
        %v1125 = vshll.u32 %v1057, 16
        %v1127 = vrot.slane %v1125, 5
        %v1128 = vor.u32 %v1124, %v1127
        %v1129 = vrot.slane %v1128, 4
        %v1131 = vshll.u32 %v1058, 16
        %v1133 = vrot.slane %v1131, 5
        %v1134 = vsel %vm316, %v1129, %v1133
        %v1136 = vshrl.u32 %v1059, 16
        %v1138 = vrot.slane %v1136, 4
        %v1139 = vshll.u32 %v1059, 16
        %v1141 = vrot.slane %v1139, 5
        %v1142 = vor.u32 %v1138, %v1141
        %v1143 = vrot.slane %v1142, 4
        %v1145 = vshll.u32 %v1060, 16
        %v1147 = vrot.slane %v1145, 5
        %v1148 = vsel %vm316, %v1143, %v1147
        %v1150 = vshrl.u32 %v1061, 16
        %v1152 = vrot.slane %v1150, 4
        %v1153 = vshll.u32 %v1061, 16
        %v1155 = vrot.slane %v1153, 5
        %v1156 = vor.u32 %v1152, %v1155
        %v1157 = vrot.slane %v1156, 4
        %v1159 = vshll.u32 %v1062, 16
        %v1161 = vrot.slane %v1159, 5
        %v1162 = vsel %vm316, %v1157, %v1161
        %v1164 = vshrl.u32 %v1063, 16
        %v1166 = vrot.slane %v1164, 4
        %v1167 = vshll.u32 %v1063, 16
        %v1169 = vrot.slane %v1167, 5
        %v1170 = vor.u32 %v1166, %v1169
        %v1171 = vrot.slane %v1170, 4
        %v1173 = vshll.u32 %v1064, 16
        %v1175 = vrot.slane %v1173, 5
        %v1176 = vsel %vm316, %v1171, %v1175
        %s1177 = scalar_lea.vmem %s1, 14
        %v1178 = vld [vmem:[%s1177] sm:$0x3]
        %v1179 = vunpack.c.l.b16 %v1078
        %v1180 = vunpack.c.l.b16 %v1092
        %v1181 = vunpack.c.l.b16 %v1106
        %v1182 = vunpack.c.l.b16 %v1120
        %v1183 = vunpack.c.l.b16 %v1134
        %v1184 = vunpack.c.l.b16 %v1148
        %v1185 = vunpack.c.l.b16 %v1162
        %v1186 = vunpack.c.l.b16 %v1176
        %v1187 = vpack.c.b16 %v1180, %v1179
        %v1188 = vpack.c.b16 %v1182, %v1181
        %v1189 = vpack.c.b16 %v1184, %v1183
        %v1190 = vpack.c.b16 %v1186, %v1185
        %v1192 = vsel %vm188, %v1187, 0
        %v1195 = vsel %vm188, %v1188, 0
        %v1198 = vsel %vm188, %v1189, 0
        %v1201 = vsel %vm188, %v1190, 0
        %v1204 = vsel %vm201, %v1178, 0
        %1206 = vmatpush.bf16.msra.mxu0 0
        %1207 = vmatpush.bf16.msra.mxu0 0
        %1208 = vmatpush.bf16.msra.mxu0 0
        %1209 = vmatpush.bf16.msra.mxu0 0
        %1210 = vmatpush.bf16.msra.mxu0 0
        %1211 = vmatpush.bf16.msra.mxu0 0
        %1212 = vmatpush.bf16.msra.mxu0 0
        %1213 = vmatpush.bf16.msra.mxu0 %v1204
        %1214 = vmatmul.bf16.gmra.mxu0 %v1192
        %v1215 = vpop.f32.mrf.mxu0
        %v1216 = vadd.f32 0.0, %v1215
        %v1217 = vpop.f32.mrf.mxu0
        %v1218 = vadd.f32 0.0, %v1217
        %1219 = vmatmul.bf16.gmra.mxu0 %v1195
        %v1220 = vpop.f32.mrf.mxu0
        %v1221 = vadd.f32 0.0, %v1220
        %v1222 = vpop.f32.mrf.mxu0
        %v1223 = vadd.f32 0.0, %v1222
        %1224 = vmatmul.bf16.gmra.mxu0 %v1198
        %v1225 = vpop.f32.mrf.mxu0
        %v1226 = vadd.f32 0.0, %v1225
        %v1227 = vpop.f32.mrf.mxu0
        %v1228 = vadd.f32 0.0, %v1227
        %1229 = vmatmul.bf16.gmra.mxu0 %v1201
        %v1230 = vpop.f32.mrf.mxu0
        %v1231 = vadd.f32 0.0, %v1230
        %v1232 = vpop.f32.mrf.mxu0
        %v1233 = vadd.f32 0.0, %v1232
        %1234 = vdwg.mxu0
        %v1235 = vadd.f32 %v1041, %v1216
        %v1236 = vadd.f32 %v1042, %v1218
        %v1237 = vadd.f32 %v1043, %v1221
        %v1238 = vadd.f32 %v1044, %v1223
        %v1239 = vadd.f32 %v1045, %v1226
        %v1240 = vadd.f32 %v1046, %v1228
        %v1241 = vadd.f32 %v1047, %v1231
        %v1242 = vadd.f32 %v1048, %v1233
        %s1243 = scalar_lea.vmem %s145, 8
        %v1244 = vld [vmem:[%s1243] sm:$0xf]
        %v1245 = vld [vmem:[%s1243 + $0x8] sm:$0xf]
        %v1246 = vld [vmem:[%s1243 + $0x10] sm:$0xf]
        %v1247 = vld [vmem:[%s1243 + $0x18] sm:$0xf]
        %v1248 = vld [vmem:[%s1243 + $0x20] sm:$0xf]
        %v1249 = vld [vmem:[%s1243 + $0x28] sm:$0xf]
        %v1250 = vld [vmem:[%s1243 + $0x30] sm:$0xf]
        %v1251 = vld [vmem:[%s1243 + $0x38] sm:$0xf]
        %s1252 = scalar_lea.vmem %s1, 16
        %v1253 = vld [vmem:[%s1252] sm:$0x3]
        %v1262 = vunpack.c.l.b16 %v1244
        %v1263 = vunpack.c.l.b16 %v1245
        %v1264 = vunpack.c.l.b16 %v1246
        %v1265 = vunpack.c.l.b16 %v1247
        %v1266 = vunpack.c.l.b16 %v1248
        %v1267 = vunpack.c.l.b16 %v1249
        %v1268 = vunpack.c.l.b16 %v1250
        %v1269 = vunpack.c.l.b16 %v1251
        %v1270 = vpack.c.b16 %v1263, %v1262
        %v1271 = vpack.c.b16 %v1265, %v1264
        %v1272 = vpack.c.b16 %v1267, %v1266
        %v1273 = vpack.c.b16 %v1269, %v1268
        %v1275 = vsel %vm188, %v1270, 0
        %v1278 = vsel %vm188, %v1271, 0
        %v1281 = vsel %vm188, %v1272, 0
        %v1284 = vsel %vm188, %v1273, 0
        %v1287 = vsel %vm201, %v1253, 0
        %1289 = vmatpush.bf16.msra.mxu0 0
        %1290 = vmatpush.bf16.msra.mxu0 0
        %1291 = vmatpush.bf16.msra.mxu0 0
        %1292 = vmatpush.bf16.msra.mxu0 0
        %1293 = vmatpush.bf16.msra.mxu0 0
        %1294 = vmatpush.bf16.msra.mxu0 0
        %1295 = vmatpush.bf16.msra.mxu0 0
        %1296 = vmatpush.bf16.msra.mxu0 %v1287
        %1297 = vmatmul.bf16.gmra.mxu0 %v1275
        %v1298 = vpop.f32.mrf.mxu0
        %v1299 = vadd.f32 0.0, %v1298
        %v1300 = vpop.f32.mrf.mxu0
        %v1301 = vadd.f32 0.0, %v1300
        %1302 = vmatmul.bf16.gmra.mxu0 %v1278
        %v1303 = vpop.f32.mrf.mxu0
        %v1304 = vadd.f32 0.0, %v1303
        %v1305 = vpop.f32.mrf.mxu0
        %v1306 = vadd.f32 0.0, %v1305
        %1307 = vmatmul.bf16.gmra.mxu0 %v1281
        %v1308 = vpop.f32.mrf.mxu0
        %v1309 = vadd.f32 0.0, %v1308
        %v1310 = vpop.f32.mrf.mxu0
        %v1311 = vadd.f32 0.0, %v1310
        %1312 = vmatmul.bf16.gmra.mxu0 %v1284
        %v1313 = vpop.f32.mrf.mxu0
        %v1314 = vadd.f32 0.0, %v1313
        %v1315 = vpop.f32.mrf.mxu0
        %v1316 = vadd.f32 0.0, %v1315
        %1317 = vdwg.mxu0
        %v1318 = vadd.f32 %v1235, %v1299
        %v1319 = vadd.f32 %v1236, %v1301
        %v1320 = vadd.f32 %v1237, %v1304
        %v1321 = vadd.f32 %v1238, %v1306
        %v1322 = vadd.f32 %v1239, %v1309
        %v1323 = vadd.f32 %v1240, %v1311
        %v1324 = vadd.f32 %v1241, %v1314
        %v1325 = vadd.f32 %v1242, %v1316
        %s1326 = scalar_lea.vmem %s145, 80
        %v1327 = vld [vmem:[%s1326] sm:$0xf]
        %v1328 = vld [vmem:[%s1326 + $0x8] sm:$0xf]
        %v1329 = vld [vmem:[%s1326 + $0x10] sm:$0xf]
        %v1330 = vld [vmem:[%s1326 + $0x18] sm:$0xf]
        %v1331 = vld [vmem:[%s1326 + $0x20] sm:$0xf]
        %v1332 = vld [vmem:[%s1326 + $0x28] sm:$0xf]
        %v1333 = vld [vmem:[%s1326 + $0x30] sm:$0xf]
        %v1334 = vld [vmem:[%s1326 + $0x38] sm:$0xf]
        %s1335 = scalar_lea.vmem %s1, 18
        %v1336 = vld [vmem:[%s1335] sm:$0x3]
        %v1345 = vunpack.c.l.b16 %v1327
        %v1346 = vunpack.c.l.b16 %v1328
        %v1347 = vunpack.c.l.b16 %v1329
        %v1348 = vunpack.c.l.b16 %v1330
        %v1349 = vunpack.c.l.b16 %v1331
        %v1350 = vunpack.c.l.b16 %v1332
        %v1351 = vunpack.c.l.b16 %v1333
        %v1352 = vunpack.c.l.b16 %v1334
        %v1353 = vpack.c.b16 %v1346, %v1345
        %v1354 = vpack.c.b16 %v1348, %v1347
        %v1355 = vpack.c.b16 %v1350, %v1349
        %v1356 = vpack.c.b16 %v1352, %v1351
        %v1358 = vsel %vm188, %v1353, 0
        %v1361 = vsel %vm188, %v1354, 0
        %v1364 = vsel %vm188, %v1355, 0
        %v1367 = vsel %vm188, %v1356, 0
        %v1370 = vsel %vm201, %v1336, 0
        %1372 = vmatpush.bf16.msra.mxu0 0
        %1373 = vmatpush.bf16.msra.mxu0 0
        %1374 = vmatpush.bf16.msra.mxu0 0
        %1375 = vmatpush.bf16.msra.mxu0 0
        %1376 = vmatpush.bf16.msra.mxu0 0
        %1377 = vmatpush.bf16.msra.mxu0 0
        %1378 = vmatpush.bf16.msra.mxu0 0
        %1379 = vmatpush.bf16.msra.mxu0 %v1370
        %1380 = vmatmul.bf16.gmra.mxu0 %v1358
        %v1381 = vpop.f32.mrf.mxu0
        %v1382 = vadd.f32 0.0, %v1381
        %v1383 = vpop.f32.mrf.mxu0
        %v1384 = vadd.f32 0.0, %v1383
        %1385 = vmatmul.bf16.gmra.mxu0 %v1361
        %v1386 = vpop.f32.mrf.mxu0
        %v1387 = vadd.f32 0.0, %v1386
        %v1388 = vpop.f32.mrf.mxu0
        %v1389 = vadd.f32 0.0, %v1388
        %1390 = vmatmul.bf16.gmra.mxu0 %v1364
        %v1391 = vpop.f32.mrf.mxu0
        %v1392 = vadd.f32 0.0, %v1391
        %v1393 = vpop.f32.mrf.mxu0
        %v1394 = vadd.f32 0.0, %v1393
        %1395 = vmatmul.bf16.gmra.mxu0 %v1367
        %v1396 = vpop.f32.mrf.mxu0
        %v1397 = vadd.f32 0.0, %v1396
        %v1398 = vpop.f32.mrf.mxu0
        %v1399 = vadd.f32 0.0, %v1398
        %1400 = vdwg.mxu0
        %v1401 = vadd.f32 %v1318, %v1382
        %v1402 = vadd.f32 %v1319, %v1384
        %v1403 = vadd.f32 %v1320, %v1387
        %v1404 = vadd.f32 %v1321, %v1389
        %v1405 = vadd.f32 %v1322, %v1392
        %v1406 = vadd.f32 %v1323, %v1394
        %v1407 = vadd.f32 %v1324, %v1397
        %v1408 = vadd.f32 %v1325, %v1399
        %v1409 = vld [vmem:[%s1243] sm:$0xf]
        %v1410 = vld [vmem:[%s1243 + $0x4] sm:$0x1]
        %v1411 = vld [vmem:[%s1243 + $0x8] sm:$0xf]
        %v1412 = vld [vmem:[%s1243 + $0xc] sm:$0x1]
        %v1413 = vld [vmem:[%s1243 + $0x10] sm:$0xf]
        %v1414 = vld [vmem:[%s1243 + $0x14] sm:$0x1]
        %v1415 = vld [vmem:[%s1243 + $0x18] sm:$0xf]
        %v1416 = vld [vmem:[%s1243 + $0x1c] sm:$0x1]
        %v1417 = vld [vmem:[%s1243 + $0x20] sm:$0xf]
        %v1418 = vld [vmem:[%s1243 + $0x24] sm:$0x1]
        %v1419 = vld [vmem:[%s1243 + $0x28] sm:$0xf]
        %v1420 = vld [vmem:[%s1243 + $0x2c] sm:$0x1]
        %v1421 = vld [vmem:[%s1243 + $0x30] sm:$0xf]
        %v1422 = vld [vmem:[%s1243 + $0x34] sm:$0x1]
        %v1423 = vld [vmem:[%s1243 + $0x38] sm:$0xf]
        %v1424 = vld [vmem:[%s1243 + $0x3c] sm:$0x1]
        %v1426 = vshrl.u32 %v1409, 16
        %v1428 = vrot.slane %v1426, 4
        %v1429 = vshll.u32 %v1409, 16
        %v1431 = vrot.slane %v1429, 5
        %v1432 = vor.u32 %v1428, %v1431
        %v1433 = vrot.slane %v1432, 4
        %v1435 = vshll.u32 %v1410, 16
        %v1437 = vrot.slane %v1435, 5
        %v1438 = vsel %vm316, %v1433, %v1437
        %v1440 = vshrl.u32 %v1411, 16
        %v1442 = vrot.slane %v1440, 4
        %v1443 = vshll.u32 %v1411, 16
        %v1445 = vrot.slane %v1443, 5
        %v1446 = vor.u32 %v1442, %v1445
        %v1447 = vrot.slane %v1446, 4
        %v1449 = vshll.u32 %v1412, 16
        %v1451 = vrot.slane %v1449, 5
        %v1452 = vsel %vm316, %v1447, %v1451
        %v1454 = vshrl.u32 %v1413, 16
        %v1456 = vrot.slane %v1454, 4
        %v1457 = vshll.u32 %v1413, 16
        %v1459 = vrot.slane %v1457, 5
        %v1460 = vor.u32 %v1456, %v1459
        %v1461 = vrot.slane %v1460, 4
        %v1463 = vshll.u32 %v1414, 16
        %v1465 = vrot.slane %v1463, 5
        %v1466 = vsel %vm316, %v1461, %v1465
        %v1468 = vshrl.u32 %v1415, 16
        %v1470 = vrot.slane %v1468, 4
        %v1471 = vshll.u32 %v1415, 16
        %v1473 = vrot.slane %v1471, 5
        %v1474 = vor.u32 %v1470, %v1473
        %v1475 = vrot.slane %v1474, 4
        %v1477 = vshll.u32 %v1416, 16
        %v1479 = vrot.slane %v1477, 5
        %v1480 = vsel %vm316, %v1475, %v1479
        %v1482 = vshrl.u32 %v1417, 16
        %v1484 = vrot.slane %v1482, 4
        %v1485 = vshll.u32 %v1417, 16
        %v1487 = vrot.slane %v1485, 5
        %v1488 = vor.u32 %v1484, %v1487
        %v1489 = vrot.slane %v1488, 4
        %v1491 = vshll.u32 %v1418, 16
        %v1493 = vrot.slane %v1491, 5
        %v1494 = vsel %vm316, %v1489, %v1493
        %v1496 = vshrl.u32 %v1419, 16
        %v1498 = vrot.slane %v1496, 4
        %v1499 = vshll.u32 %v1419, 16
        %v1501 = vrot.slane %v1499, 5
        %v1502 = vor.u32 %v1498, %v1501
        %v1503 = vrot.slane %v1502, 4
        %v1505 = vshll.u32 %v1420, 16
        %v1507 = vrot.slane %v1505, 5
        %v1508 = vsel %vm316, %v1503, %v1507
        %v1510 = vshrl.u32 %v1421, 16
        %v1512 = vrot.slane %v1510, 4
        %v1513 = vshll.u32 %v1421, 16
        %v1515 = vrot.slane %v1513, 5
        %v1516 = vor.u32 %v1512, %v1515
        %v1517 = vrot.slane %v1516, 4
        %v1519 = vshll.u32 %v1422, 16
        %v1521 = vrot.slane %v1519, 5
        %v1522 = vsel %vm316, %v1517, %v1521
        %v1524 = vshrl.u32 %v1423, 16
        %v1526 = vrot.slane %v1524, 4
        %v1527 = vshll.u32 %v1423, 16
        %v1529 = vrot.slane %v1527, 5
        %v1530 = vor.u32 %v1526, %v1529
        %v1531 = vrot.slane %v1530, 4
        %v1533 = vshll.u32 %v1424, 16
        %v1535 = vrot.slane %v1533, 5
        %v1536 = vsel %vm316, %v1531, %v1535
        %s1537 = scalar_lea.vmem %s1, 20
        %v1538 = vld [vmem:[%s1537] sm:$0x3]
        %v1539 = vunpack.c.l.b16 %v1438
        %v1540 = vunpack.c.l.b16 %v1452
        %v1541 = vunpack.c.l.b16 %v1466
        %v1542 = vunpack.c.l.b16 %v1480
        %v1543 = vunpack.c.l.b16 %v1494
        %v1544 = vunpack.c.l.b16 %v1508
        %v1545 = vunpack.c.l.b16 %v1522
        %v1546 = vunpack.c.l.b16 %v1536
        %v1547 = vpack.c.b16 %v1540, %v1539
        %v1548 = vpack.c.b16 %v1542, %v1541
        %v1549 = vpack.c.b16 %v1544, %v1543
        %v1550 = vpack.c.b16 %v1546, %v1545
        %v1552 = vsel %vm188, %v1547, 0
        %v1555 = vsel %vm188, %v1548, 0
        %v1558 = vsel %vm188, %v1549, 0
        %v1561 = vsel %vm188, %v1550, 0
        %v1564 = vsel %vm201, %v1538, 0
        %1566 = vmatpush.bf16.msra.mxu0 0
        %1567 = vmatpush.bf16.msra.mxu0 0
        %1568 = vmatpush.bf16.msra.mxu0 0
        %1569 = vmatpush.bf16.msra.mxu0 0
        %1570 = vmatpush.bf16.msra.mxu0 0
        %1571 = vmatpush.bf16.msra.mxu0 0
        %1572 = vmatpush.bf16.msra.mxu0 0
        %1573 = vmatpush.bf16.msra.mxu0 %v1564
        %1574 = vmatmul.bf16.gmra.mxu0 %v1552
        %v1575 = vpop.f32.mrf.mxu0
        %v1576 = vadd.f32 0.0, %v1575
        %v1577 = vpop.f32.mrf.mxu0
        %v1578 = vadd.f32 0.0, %v1577
        %1579 = vmatmul.bf16.gmra.mxu0 %v1555
        %v1580 = vpop.f32.mrf.mxu0
        %v1581 = vadd.f32 0.0, %v1580
        %v1582 = vpop.f32.mrf.mxu0
        %v1583 = vadd.f32 0.0, %v1582
        %1584 = vmatmul.bf16.gmra.mxu0 %v1558
        %v1585 = vpop.f32.mrf.mxu0
        %v1586 = vadd.f32 0.0, %v1585
        %v1587 = vpop.f32.mrf.mxu0
        %v1588 = vadd.f32 0.0, %v1587
        %1589 = vmatmul.bf16.gmra.mxu0 %v1561
        %v1590 = vpop.f32.mrf.mxu0
        %v1591 = vadd.f32 0.0, %v1590
        %v1592 = vpop.f32.mrf.mxu0
        %v1593 = vadd.f32 0.0, %v1592
        %1594 = vdwg.mxu0
        %v1595 = vadd.f32 %v1401, %v1576
        %v1596 = vadd.f32 %v1402, %v1578
        %v1597 = vadd.f32 %v1403, %v1581
        %v1598 = vadd.f32 %v1404, %v1583
        %v1599 = vadd.f32 %v1405, %v1586
        %v1600 = vadd.f32 %v1406, %v1588
        %v1601 = vadd.f32 %v1407, %v1591
        %v1602 = vadd.f32 %v1408, %v1593
        %v1603 = vld [vmem:[%s1326] sm:$0xf]
        %v1604 = vld [vmem:[%s1326 + $0x4] sm:$0x1]
        %v1605 = vld [vmem:[%s1326 + $0x8] sm:$0xf]
        %v1606 = vld [vmem:[%s1326 + $0xc] sm:$0x1]
        %v1607 = vld [vmem:[%s1326 + $0x10] sm:$0xf]
        %v1608 = vld [vmem:[%s1326 + $0x14] sm:$0x1]
        %v1609 = vld [vmem:[%s1326 + $0x18] sm:$0xf]
        %v1610 = vld [vmem:[%s1326 + $0x1c] sm:$0x1]
        %v1611 = vld [vmem:[%s1326 + $0x20] sm:$0xf]
        %v1612 = vld [vmem:[%s1326 + $0x24] sm:$0x1]
        %v1613 = vld [vmem:[%s1326 + $0x28] sm:$0xf]
        %v1614 = vld [vmem:[%s1326 + $0x2c] sm:$0x1]
        %v1615 = vld [vmem:[%s1326 + $0x30] sm:$0xf]
        %v1616 = vld [vmem:[%s1326 + $0x34] sm:$0x1]
        %v1617 = vld [vmem:[%s1326 + $0x38] sm:$0xf]
        %v1618 = vld [vmem:[%s1326 + $0x3c] sm:$0x1]
        %v1620 = vshrl.u32 %v1603, 16
        %v1622 = vrot.slane %v1620, 4
        %v1623 = vshll.u32 %v1603, 16
        %v1625 = vrot.slane %v1623, 5
        %v1626 = vor.u32 %v1622, %v1625
        %v1627 = vrot.slane %v1626, 4
        %v1629 = vshll.u32 %v1604, 16
        %v1631 = vrot.slane %v1629, 5
        %v1632 = vsel %vm316, %v1627, %v1631
        %v1634 = vshrl.u32 %v1605, 16
        %v1636 = vrot.slane %v1634, 4
        %v1637 = vshll.u32 %v1605, 16
        %v1639 = vrot.slane %v1637, 5
        %v1640 = vor.u32 %v1636, %v1639
        %v1641 = vrot.slane %v1640, 4
        %v1643 = vshll.u32 %v1606, 16
        %v1645 = vrot.slane %v1643, 5
        %v1646 = vsel %vm316, %v1641, %v1645
        %v1648 = vshrl.u32 %v1607, 16
        %v1650 = vrot.slane %v1648, 4
        %v1651 = vshll.u32 %v1607, 16
        %v1653 = vrot.slane %v1651, 5
        %v1654 = vor.u32 %v1650, %v1653
        %v1655 = vrot.slane %v1654, 4
        %v1657 = vshll.u32 %v1608, 16
        %v1659 = vrot.slane %v1657, 5
        %v1660 = vsel %vm316, %v1655, %v1659
        %v1662 = vshrl.u32 %v1609, 16
        %v1664 = vrot.slane %v1662, 4
        %v1665 = vshll.u32 %v1609, 16
        %v1667 = vrot.slane %v1665, 5
        %v1668 = vor.u32 %v1664, %v1667
        %v1669 = vrot.slane %v1668, 4
        %v1671 = vshll.u32 %v1610, 16
        %v1673 = vrot.slane %v1671, 5
        %v1674 = vsel %vm316, %v1669, %v1673
        %v1676 = vshrl.u32 %v1611, 16
        %v1678 = vrot.slane %v1676, 4
        %v1679 = vshll.u32 %v1611, 16
        %v1681 = vrot.slane %v1679, 5
        %v1682 = vor.u32 %v1678, %v1681
        %v1683 = vrot.slane %v1682, 4
        %v1685 = vshll.u32 %v1612, 16
        %v1687 = vrot.slane %v1685, 5
        %v1688 = vsel %vm316, %v1683, %v1687
        %v1690 = vshrl.u32 %v1613, 16
        %v1692 = vrot.slane %v1690, 4
        %v1693 = vshll.u32 %v1613, 16
        %v1695 = vrot.slane %v1693, 5
        %v1696 = vor.u32 %v1692, %v1695
        %v1697 = vrot.slane %v1696, 4
        %v1699 = vshll.u32 %v1614, 16
        %v1701 = vrot.slane %v1699, 5
        %v1702 = vsel %vm316, %v1697, %v1701
        %v1704 = vshrl.u32 %v1615, 16
        %v1706 = vrot.slane %v1704, 4
        %v1707 = vshll.u32 %v1615, 16
        %v1709 = vrot.slane %v1707, 5
        %v1710 = vor.u32 %v1706, %v1709
        %v1711 = vrot.slane %v1710, 4
        %v1713 = vshll.u32 %v1616, 16
        %v1715 = vrot.slane %v1713, 5
        %v1716 = vsel %vm316, %v1711, %v1715
        %v1718 = vshrl.u32 %v1617, 16
        %v1720 = vrot.slane %v1718, 4
        %v1721 = vshll.u32 %v1617, 16
        %v1723 = vrot.slane %v1721, 5
        %v1724 = vor.u32 %v1720, %v1723
        %v1725 = vrot.slane %v1724, 4
        %v1727 = vshll.u32 %v1618, 16
        %v1729 = vrot.slane %v1727, 5
        %v1730 = vsel %vm316, %v1725, %v1729
        %s1731 = scalar_lea.vmem %s1, 22
        %v1732 = vld [vmem:[%s1731] sm:$0x3]
        %v1733 = vunpack.c.l.b16 %v1632
        %v1734 = vunpack.c.l.b16 %v1646
        %v1735 = vunpack.c.l.b16 %v1660
        %v1736 = vunpack.c.l.b16 %v1674
        %v1737 = vunpack.c.l.b16 %v1688
        %v1738 = vunpack.c.l.b16 %v1702
        %v1739 = vunpack.c.l.b16 %v1716
        %v1740 = vunpack.c.l.b16 %v1730
        %v1741 = vpack.c.b16 %v1734, %v1733
        %v1742 = vpack.c.b16 %v1736, %v1735
        %v1743 = vpack.c.b16 %v1738, %v1737
        %v1744 = vpack.c.b16 %v1740, %v1739
        %v1746 = vsel %vm188, %v1741, 0
        %v1749 = vsel %vm188, %v1742, 0
        %v1752 = vsel %vm188, %v1743, 0
        %v1755 = vsel %vm188, %v1744, 0
        %v1758 = vsel %vm201, %v1732, 0
        %1760 = vmatpush.bf16.msra.mxu0 0
        %1761 = vmatpush.bf16.msra.mxu0 0
        %1762 = vmatpush.bf16.msra.mxu0 0
        %1763 = vmatpush.bf16.msra.mxu0 0
        %1764 = vmatpush.bf16.msra.mxu0 0
        %1765 = vmatpush.bf16.msra.mxu0 0
        %1766 = vmatpush.bf16.msra.mxu0 0
        %1767 = vmatpush.bf16.msra.mxu0 %v1758
        %1768 = vmatmul.bf16.gmra.mxu0 %v1746
        %v1769 = vpop.f32.mrf.mxu0
        %v1770 = vadd.f32 0.0, %v1769
        %v1771 = vpop.f32.mrf.mxu0
        %v1772 = vadd.f32 0.0, %v1771
        %1773 = vmatmul.bf16.gmra.mxu0 %v1749
        %v1774 = vpop.f32.mrf.mxu0
        %v1775 = vadd.f32 0.0, %v1774
        %v1776 = vpop.f32.mrf.mxu0
        %v1777 = vadd.f32 0.0, %v1776
        %1778 = vmatmul.bf16.gmra.mxu0 %v1752
        %v1779 = vpop.f32.mrf.mxu0
        %v1780 = vadd.f32 0.0, %v1779
        %v1781 = vpop.f32.mrf.mxu0
        %v1782 = vadd.f32 0.0, %v1781
        %1783 = vmatmul.bf16.gmra.mxu0 %v1755
        %v1784 = vpop.f32.mrf.mxu0
        %v1785 = vadd.f32 0.0, %v1784
        %v1786 = vpop.f32.mrf.mxu0
        %v1787 = vadd.f32 0.0, %v1786
        %1788 = vdwg.mxu0
        %v1789 = vadd.f32 %v1595, %v1770
        %v1790 = vadd.f32 %v1596, %v1772
        %v1791 = vadd.f32 %v1597, %v1775
        %v1792 = vadd.f32 %v1598, %v1777
        %v1793 = vadd.f32 %v1599, %v1780
        %v1794 = vadd.f32 %v1600, %v1782
        %v1795 = vadd.f32 %v1601, %v1785
        %v1796 = vadd.f32 %v1602, %v1787
        %s1797 = scalar_lea.vmem %s145, 152
        %v1798 = vld [vmem:[%s1797] sm:$0xf]
        %v1799 = vld [vmem:[%s1797 + $0x8] sm:$0xf]
        %v1800 = vld [vmem:[%s1797 + $0x10] sm:$0xf]
        %v1801 = vld [vmem:[%s1797 + $0x18] sm:$0xf]
        %v1802 = vld [vmem:[%s1797 + $0x20] sm:$0xf]
        %v1803 = vld [vmem:[%s1797 + $0x28] sm:$0xf]
        %v1804 = vld [vmem:[%s1797 + $0x30] sm:$0xf]
        %v1805 = vld [vmem:[%s1797 + $0x38] sm:$0xf]
        %s1806 = scalar_lea.vmem %s1, 24
        %v1807 = vld [vmem:[%s1806] sm:$0x3]
        %v1816 = vunpack.c.l.b16 %v1798
        %v1817 = vunpack.c.l.b16 %v1799
        %v1818 = vunpack.c.l.b16 %v1800
        %v1819 = vunpack.c.l.b16 %v1801
        %v1820 = vunpack.c.l.b16 %v1802
        %v1821 = vunpack.c.l.b16 %v1803
        %v1822 = vunpack.c.l.b16 %v1804
        %v1823 = vunpack.c.l.b16 %v1805
        %v1824 = vpack.c.b16 %v1817, %v1816
        %v1825 = vpack.c.b16 %v1819, %v1818
        %v1826 = vpack.c.b16 %v1821, %v1820
        %v1827 = vpack.c.b16 %v1823, %v1822
        %v1829 = vsel %vm188, %v1824, 0
        %v1832 = vsel %vm188, %v1825, 0
        %v1835 = vsel %vm188, %v1826, 0
        %v1838 = vsel %vm188, %v1827, 0
        %v1841 = vsel %vm201, %v1807, 0
        %1843 = vmatpush.bf16.msra.mxu0 0
        %1844 = vmatpush.bf16.msra.mxu0 0
        %1845 = vmatpush.bf16.msra.mxu0 0
        %1846 = vmatpush.bf16.msra.mxu0 0
        %1847 = vmatpush.bf16.msra.mxu0 0
        %1848 = vmatpush.bf16.msra.mxu0 0
        %1849 = vmatpush.bf16.msra.mxu0 0
        %1850 = vmatpush.bf16.msra.mxu0 %v1841
        %1851 = vmatmul.bf16.gmra.mxu0 %v1829
        %v1852 = vpop.f32.mrf.mxu0
        %v1853 = vadd.f32 0.0, %v1852
        %v1854 = vpop.f32.mrf.mxu0
        %v1855 = vadd.f32 0.0, %v1854
        %1856 = vmatmul.bf16.gmra.mxu0 %v1832
        %v1857 = vpop.f32.mrf.mxu0
        %v1858 = vadd.f32 0.0, %v1857
        %v1859 = vpop.f32.mrf.mxu0
        %v1860 = vadd.f32 0.0, %v1859
        %1861 = vmatmul.bf16.gmra.mxu0 %v1835
        %v1862 = vpop.f32.mrf.mxu0
        %v1863 = vadd.f32 0.0, %v1862
        %v1864 = vpop.f32.mrf.mxu0
        %v1865 = vadd.f32 0.0, %v1864
        %1866 = vmatmul.bf16.gmra.mxu0 %v1838
        %v1867 = vpop.f32.mrf.mxu0
        %v1868 = vadd.f32 0.0, %v1867
        %v1869 = vpop.f32.mrf.mxu0
        %v1870 = vadd.f32 0.0, %v1869
        %1871 = vdwg.mxu0
        %v1872 = vadd.f32 %v1789, %v1853
        %v1873 = vadd.f32 %v1790, %v1855
        %v1874 = vadd.f32 %v1791, %v1858
        %v1875 = vadd.f32 %v1792, %v1860
        %v1876 = vadd.f32 %v1793, %v1863
        %v1877 = vadd.f32 %v1794, %v1865
        %v1878 = vadd.f32 %v1795, %v1868
        %v1879 = vadd.f32 %v1796, %v1870
        %s1880 = scalar_lea.vmem %s145, 224
        %v1881 = vld [vmem:[%s1880] sm:$0xf]
        %v1882 = vld [vmem:[%s1880 + $0x8] sm:$0xf]
        %v1883 = vld [vmem:[%s1880 + $0x10] sm:$0xf]
        %v1884 = vld [vmem:[%s1880 + $0x18] sm:$0xf]
        %v1885 = vld [vmem:[%s1880 + $0x20] sm:$0xf]
        %v1886 = vld [vmem:[%s1880 + $0x28] sm:$0xf]
        %v1887 = vld [vmem:[%s1880 + $0x30] sm:$0xf]
        %v1888 = vld [vmem:[%s1880 + $0x38] sm:$0xf]
        %s1889 = scalar_lea.vmem %s1, 26
        %v1890 = vld [vmem:[%s1889] sm:$0x3]
        %v1899 = vunpack.c.l.b16 %v1881
        %v1900 = vunpack.c.l.b16 %v1882
        %v1901 = vunpack.c.l.b16 %v1883
        %v1902 = vunpack.c.l.b16 %v1884
        %v1903 = vunpack.c.l.b16 %v1885
        %v1904 = vunpack.c.l.b16 %v1886
        %v1905 = vunpack.c.l.b16 %v1887
        %v1906 = vunpack.c.l.b16 %v1888
        %v1907 = vpack.c.b16 %v1900, %v1899
        %v1908 = vpack.c.b16 %v1902, %v1901
        %v1909 = vpack.c.b16 %v1904, %v1903
        %v1910 = vpack.c.b16 %v1906, %v1905
        %v1912 = vsel %vm188, %v1907, 0
        %v1915 = vsel %vm188, %v1908, 0
        %v1918 = vsel %vm188, %v1909, 0
        %v1921 = vsel %vm188, %v1910, 0
        %v1924 = vsel %vm201, %v1890, 0
        %1926 = vmatpush.bf16.msra.mxu0 0
        %1927 = vmatpush.bf16.msra.mxu0 0
        %1928 = vmatpush.bf16.msra.mxu0 0
        %1929 = vmatpush.bf16.msra.mxu0 0
        %1930 = vmatpush.bf16.msra.mxu0 0
        %1931 = vmatpush.bf16.msra.mxu0 0
        %1932 = vmatpush.bf16.msra.mxu0 0
        %1933 = vmatpush.bf16.msra.mxu0 %v1924
        %1934 = vmatmul.bf16.gmra.mxu0 %v1912
        %v1935 = vpop.f32.mrf.mxu0
        %v1936 = vadd.f32 0.0, %v1935
        %v1937 = vpop.f32.mrf.mxu0
        %v1938 = vadd.f32 0.0, %v1937
        %1939 = vmatmul.bf16.gmra.mxu0 %v1915
        %v1940 = vpop.f32.mrf.mxu0
        %v1941 = vadd.f32 0.0, %v1940
        %v1942 = vpop.f32.mrf.mxu0
        %v1943 = vadd.f32 0.0, %v1942
        %1944 = vmatmul.bf16.gmra.mxu0 %v1918
        %v1945 = vpop.f32.mrf.mxu0
        %v1946 = vadd.f32 0.0, %v1945
        %v1947 = vpop.f32.mrf.mxu0
        %v1948 = vadd.f32 0.0, %v1947
        %1949 = vmatmul.bf16.gmra.mxu0 %v1921
        %v1950 = vpop.f32.mrf.mxu0
        %v1951 = vadd.f32 0.0, %v1950
        %v1952 = vpop.f32.mrf.mxu0
        %v1953 = vadd.f32 0.0, %v1952
        %1954 = vdwg.mxu0
        %v1955 = vadd.f32 %v1872, %v1936
        %v1956 = vadd.f32 %v1873, %v1938
        %v1957 = vadd.f32 %v1874, %v1941
        %v1958 = vadd.f32 %v1875, %v1943
        %v1959 = vadd.f32 %v1876, %v1946
        %v1960 = vadd.f32 %v1877, %v1948
        %v1961 = vadd.f32 %v1878, %v1951
        %v1962 = vadd.f32 %v1879, %v1953
        %v1963 = vld [vmem:[%s1797] sm:$0xf]
        %v1964 = vld [vmem:[%s1797 + $0x4] sm:$0x1]
        %v1965 = vld [vmem:[%s1797 + $0x8] sm:$0xf]
        %v1966 = vld [vmem:[%s1797 + $0xc] sm:$0x1]
        %v1967 = vld [vmem:[%s1797 + $0x10] sm:$0xf]
        %v1968 = vld [vmem:[%s1797 + $0x14] sm:$0x1]
        %v1969 = vld [vmem:[%s1797 + $0x18] sm:$0xf]
        %v1970 = vld [vmem:[%s1797 + $0x1c] sm:$0x1]
        %v1971 = vld [vmem:[%s1797 + $0x20] sm:$0xf]
        %v1972 = vld [vmem:[%s1797 + $0x24] sm:$0x1]
        %v1973 = vld [vmem:[%s1797 + $0x28] sm:$0xf]
        %v1974 = vld [vmem:[%s1797 + $0x2c] sm:$0x1]
        %v1975 = vld [vmem:[%s1797 + $0x30] sm:$0xf]
        %v1976 = vld [vmem:[%s1797 + $0x34] sm:$0x1]
        %v1977 = vld [vmem:[%s1797 + $0x38] sm:$0xf]
        %v1978 = vld [vmem:[%s1797 + $0x3c] sm:$0x1]
        %v1980 = vshrl.u32 %v1963, 16
        %v1982 = vrot.slane %v1980, 4
        %v1983 = vshll.u32 %v1963, 16
        %v1985 = vrot.slane %v1983, 5
        %v1986 = vor.u32 %v1982, %v1985
        %v1987 = vrot.slane %v1986, 4
        %v1989 = vshll.u32 %v1964, 16
        %v1991 = vrot.slane %v1989, 5
        %v1992 = vsel %vm316, %v1987, %v1991
        %v1994 = vshrl.u32 %v1965, 16
        %v1996 = vrot.slane %v1994, 4
        %v1997 = vshll.u32 %v1965, 16
        %v1999 = vrot.slane %v1997, 5
        %v2000 = vor.u32 %v1996, %v1999
        %v2001 = vrot.slane %v2000, 4
        %v2003 = vshll.u32 %v1966, 16
        %v2005 = vrot.slane %v2003, 5
        %v2006 = vsel %vm316, %v2001, %v2005
        %v2008 = vshrl.u32 %v1967, 16
        %v2010 = vrot.slane %v2008, 4
        %v2011 = vshll.u32 %v1967, 16
        %v2013 = vrot.slane %v2011, 5
        %v2014 = vor.u32 %v2010, %v2013
        %v2015 = vrot.slane %v2014, 4
        %v2017 = vshll.u32 %v1968, 16
        %v2019 = vrot.slane %v2017, 5
        %v2020 = vsel %vm316, %v2015, %v2019
        %v2022 = vshrl.u32 %v1969, 16
        %v2024 = vrot.slane %v2022, 4
        %v2025 = vshll.u32 %v1969, 16
        %v2027 = vrot.slane %v2025, 5
        %v2028 = vor.u32 %v2024, %v2027
        %v2029 = vrot.slane %v2028, 4
        %v2031 = vshll.u32 %v1970, 16
        %v2033 = vrot.slane %v2031, 5
        %v2034 = vsel %vm316, %v2029, %v2033
        %v2036 = vshrl.u32 %v1971, 16
        %v2038 = vrot.slane %v2036, 4
        %v2039 = vshll.u32 %v1971, 16
        %v2041 = vrot.slane %v2039, 5
        %v2042 = vor.u32 %v2038, %v2041
        %v2043 = vrot.slane %v2042, 4
        %v2045 = vshll.u32 %v1972, 16
        %v2047 = vrot.slane %v2045, 5
        %v2048 = vsel %vm316, %v2043, %v2047
        %v2050 = vshrl.u32 %v1973, 16
        %v2052 = vrot.slane %v2050, 4
        %v2053 = vshll.u32 %v1973, 16
        %v2055 = vrot.slane %v2053, 5
        %v2056 = vor.u32 %v2052, %v2055
        %v2057 = vrot.slane %v2056, 4
        %v2059 = vshll.u32 %v1974, 16
        %v2061 = vrot.slane %v2059, 5
        %v2062 = vsel %vm316, %v2057, %v2061
        %v2064 = vshrl.u32 %v1975, 16
        %v2066 = vrot.slane %v2064, 4
        %v2067 = vshll.u32 %v1975, 16
        %v2069 = vrot.slane %v2067, 5
        %v2070 = vor.u32 %v2066, %v2069
        %v2071 = vrot.slane %v2070, 4
        %v2073 = vshll.u32 %v1976, 16
        %v2075 = vrot.slane %v2073, 5
        %v2076 = vsel %vm316, %v2071, %v2075
        %v2078 = vshrl.u32 %v1977, 16
        %v2080 = vrot.slane %v2078, 4
        %v2081 = vshll.u32 %v1977, 16
        %v2083 = vrot.slane %v2081, 5
        %v2084 = vor.u32 %v2080, %v2083
        %v2085 = vrot.slane %v2084, 4
        %v2087 = vshll.u32 %v1978, 16
        %v2089 = vrot.slane %v2087, 5
        %v2090 = vsel %vm316, %v2085, %v2089
        %s2091 = scalar_lea.vmem %s1, 28
        %v2092 = vld [vmem:[%s2091] sm:$0x3]
        %v2093 = vunpack.c.l.b16 %v1992
        %v2094 = vunpack.c.l.b16 %v2006
        %v2095 = vunpack.c.l.b16 %v2020
        %v2096 = vunpack.c.l.b16 %v2034
        %v2097 = vunpack.c.l.b16 %v2048
        %v2098 = vunpack.c.l.b16 %v2062
        %v2099 = vunpack.c.l.b16 %v2076
        %v2100 = vunpack.c.l.b16 %v2090
        %v2101 = vpack.c.b16 %v2094, %v2093
        %v2102 = vpack.c.b16 %v2096, %v2095
        %v2103 = vpack.c.b16 %v2098, %v2097
        %v2104 = vpack.c.b16 %v2100, %v2099
        %v2106 = vsel %vm188, %v2101, 0
        %v2109 = vsel %vm188, %v2102, 0
        %v2112 = vsel %vm188, %v2103, 0
        %v2115 = vsel %vm188, %v2104, 0
        %v2118 = vsel %vm201, %v2092, 0
        %2120 = vmatpush.bf16.msra.mxu0 0
        %2121 = vmatpush.bf16.msra.mxu0 0
        %2122 = vmatpush.bf16.msra.mxu0 0
        %2123 = vmatpush.bf16.msra.mxu0 0
        %2124 = vmatpush.bf16.msra.mxu0 0
        %2125 = vmatpush.bf16.msra.mxu0 0
        %2126 = vmatpush.bf16.msra.mxu0 0
        %2127 = vmatpush.bf16.msra.mxu0 %v2118
        %2128 = vmatmul.bf16.gmra.mxu0 %v2106
        %v2129 = vpop.f32.mrf.mxu0
        %v2130 = vadd.f32 0.0, %v2129
        %v2131 = vpop.f32.mrf.mxu0
        %v2132 = vadd.f32 0.0, %v2131
        %2133 = vmatmul.bf16.gmra.mxu0 %v2109
        %v2134 = vpop.f32.mrf.mxu0
        %v2135 = vadd.f32 0.0, %v2134
        %v2136 = vpop.f32.mrf.mxu0
        %v2137 = vadd.f32 0.0, %v2136
        %2138 = vmatmul.bf16.gmra.mxu0 %v2112
        %v2139 = vpop.f32.mrf.mxu0
        %v2140 = vadd.f32 0.0, %v2139
        %v2141 = vpop.f32.mrf.mxu0
        %v2142 = vadd.f32 0.0, %v2141
        %2143 = vmatmul.bf16.gmra.mxu0 %v2115
        %v2144 = vpop.f32.mrf.mxu0
        %v2145 = vadd.f32 0.0, %v2144
        %v2146 = vpop.f32.mrf.mxu0
        %v2147 = vadd.f32 0.0, %v2146
        %2148 = vdwg.mxu0
        %v2149 = vadd.f32 %v1955, %v2130
        %v2150 = vadd.f32 %v1956, %v2132
        %v2151 = vadd.f32 %v1957, %v2135
        %v2152 = vadd.f32 %v1958, %v2137
        %v2153 = vadd.f32 %v1959, %v2140
        %v2154 = vadd.f32 %v1960, %v2142
        %v2155 = vadd.f32 %v1961, %v2145
        %v2156 = vadd.f32 %v1962, %v2147
        %v2157 = vld [vmem:[%s1880] sm:$0xf]
        %v2158 = vld [vmem:[%s1880 + $0x4] sm:$0x1]
        %v2159 = vld [vmem:[%s1880 + $0x8] sm:$0xf]
        %v2160 = vld [vmem:[%s1880 + $0xc] sm:$0x1]
        %v2161 = vld [vmem:[%s1880 + $0x10] sm:$0xf]
        %v2162 = vld [vmem:[%s1880 + $0x14] sm:$0x1]
        %v2163 = vld [vmem:[%s1880 + $0x18] sm:$0xf]
        %v2164 = vld [vmem:[%s1880 + $0x1c] sm:$0x1]
        %v2165 = vld [vmem:[%s1880 + $0x20] sm:$0xf]
        %v2166 = vld [vmem:[%s1880 + $0x24] sm:$0x1]
        %v2167 = vld [vmem:[%s1880 + $0x28] sm:$0xf]
        %v2168 = vld [vmem:[%s1880 + $0x2c] sm:$0x1]
        %v2169 = vld [vmem:[%s1880 + $0x30] sm:$0xf]
        %v2170 = vld [vmem:[%s1880 + $0x34] sm:$0x1]
        %v2171 = vld [vmem:[%s1880 + $0x38] sm:$0xf]
        %v2172 = vld [vmem:[%s1880 + $0x3c] sm:$0x1]
        %v2174 = vshrl.u32 %v2157, 16
        %v2176 = vrot.slane %v2174, 4
        %v2177 = vshll.u32 %v2157, 16
        %v2179 = vrot.slane %v2177, 5
        %v2180 = vor.u32 %v2176, %v2179
        %v2181 = vrot.slane %v2180, 4
        %v2183 = vshll.u32 %v2158, 16
        %v2185 = vrot.slane %v2183, 5
        %v2186 = vsel %vm316, %v2181, %v2185
        %v2188 = vshrl.u32 %v2159, 16
        %v2190 = vrot.slane %v2188, 4
        %v2191 = vshll.u32 %v2159, 16
        %v2193 = vrot.slane %v2191, 5
        %v2194 = vor.u32 %v2190, %v2193
        %v2195 = vrot.slane %v2194, 4
        %v2197 = vshll.u32 %v2160, 16
        %v2199 = vrot.slane %v2197, 5
        %v2200 = vsel %vm316, %v2195, %v2199
        %v2202 = vshrl.u32 %v2161, 16
        %v2204 = vrot.slane %v2202, 4
        %v2205 = vshll.u32 %v2161, 16
        %v2207 = vrot.slane %v2205, 5
        %v2208 = vor.u32 %v2204, %v2207
        %v2209 = vrot.slane %v2208, 4
        %v2211 = vshll.u32 %v2162, 16
        %v2213 = vrot.slane %v2211, 5
        %v2214 = vsel %vm316, %v2209, %v2213
        %v2216 = vshrl.u32 %v2163, 16
        %v2218 = vrot.slane %v2216, 4
        %v2219 = vshll.u32 %v2163, 16
        %v2221 = vrot.slane %v2219, 5
        %v2222 = vor.u32 %v2218, %v2221
        %v2223 = vrot.slane %v2222, 4
        %v2225 = vshll.u32 %v2164, 16
        %v2227 = vrot.slane %v2225, 5
        %v2228 = vsel %vm316, %v2223, %v2227
        %v2230 = vshrl.u32 %v2165, 16
        %v2232 = vrot.slane %v2230, 4
        %v2233 = vshll.u32 %v2165, 16
        %v2235 = vrot.slane %v2233, 5
        %v2236 = vor.u32 %v2232, %v2235
        %v2237 = vrot.slane %v2236, 4
        %v2239 = vshll.u32 %v2166, 16
        %v2241 = vrot.slane %v2239, 5
        %v2242 = vsel %vm316, %v2237, %v2241
        %v2244 = vshrl.u32 %v2167, 16
        %v2246 = vrot.slane %v2244, 4
        %v2247 = vshll.u32 %v2167, 16
        %v2249 = vrot.slane %v2247, 5
        %v2250 = vor.u32 %v2246, %v2249
        %v2251 = vrot.slane %v2250, 4
        %v2253 = vshll.u32 %v2168, 16
        %v2255 = vrot.slane %v2253, 5
        %v2256 = vsel %vm316, %v2251, %v2255
        %v2258 = vshrl.u32 %v2169, 16
        %v2260 = vrot.slane %v2258, 4
        %v2261 = vshll.u32 %v2169, 16
        %v2263 = vrot.slane %v2261, 5
        %v2264 = vor.u32 %v2260, %v2263
        %v2265 = vrot.slane %v2264, 4
        %v2267 = vshll.u32 %v2170, 16
        %v2269 = vrot.slane %v2267, 5
        %v2270 = vsel %vm316, %v2265, %v2269
        %v2272 = vshrl.u32 %v2171, 16
        %v2274 = vrot.slane %v2272, 4
        %v2275 = vshll.u32 %v2171, 16
        %v2277 = vrot.slane %v2275, 5
        %v2278 = vor.u32 %v2274, %v2277
        %v2279 = vrot.slane %v2278, 4
        %v2281 = vshll.u32 %v2172, 16
        %v2283 = vrot.slane %v2281, 5
        %v2284 = vsel %vm316, %v2279, %v2283
        %s2285 = scalar_lea.vmem %s1, 30
        %v2286 = vld [vmem:[%s2285] sm:$0x3]
        %v2287 = vunpack.c.l.b16 %v2186
        %v2288 = vunpack.c.l.b16 %v2200
        %v2289 = vunpack.c.l.b16 %v2214
        %v2290 = vunpack.c.l.b16 %v2228
        %v2291 = vunpack.c.l.b16 %v2242
        %v2292 = vunpack.c.l.b16 %v2256
        %v2293 = vunpack.c.l.b16 %v2270
        %v2294 = vunpack.c.l.b16 %v2284
        %v2295 = vpack.c.b16 %v2288, %v2287
        %v2296 = vpack.c.b16 %v2290, %v2289
        %v2297 = vpack.c.b16 %v2292, %v2291
        %v2298 = vpack.c.b16 %v2294, %v2293
        %v2300 = vsel %vm188, %v2295, 0
        %v2303 = vsel %vm188, %v2296, 0
        %v2306 = vsel %vm188, %v2297, 0
        %v2309 = vsel %vm188, %v2298, 0
        %v2312 = vsel %vm201, %v2286, 0
        %2314 = vmatpush.bf16.msra.mxu0 0
        %2315 = vmatpush.bf16.msra.mxu0 0
        %2316 = vmatpush.bf16.msra.mxu0 0
        %2317 = vmatpush.bf16.msra.mxu0 0
        %2318 = vmatpush.bf16.msra.mxu0 0
        %2319 = vmatpush.bf16.msra.mxu0 0
        %2320 = vmatpush.bf16.msra.mxu0 0
        %2321 = vmatpush.bf16.msra.mxu0 %v2312
        %2322 = vmatmul.bf16.gmra.mxu0 %v2300
        %v2323 = vpop.f32.mrf.mxu0
        %v2324 = vadd.f32 0.0, %v2323
        %v2325 = vpop.f32.mrf.mxu0
        %v2326 = vadd.f32 0.0, %v2325
        %2327 = vmatmul.bf16.gmra.mxu0 %v2303
        %v2328 = vpop.f32.mrf.mxu0
        %v2329 = vadd.f32 0.0, %v2328
        %v2330 = vpop.f32.mrf.mxu0
        %v2331 = vadd.f32 0.0, %v2330
        %2332 = vmatmul.bf16.gmra.mxu0 %v2306
        %v2333 = vpop.f32.mrf.mxu0
        %v2334 = vadd.f32 0.0, %v2333
        %v2335 = vpop.f32.mrf.mxu0
        %v2336 = vadd.f32 0.0, %v2335
        %2337 = vmatmul.bf16.gmra.mxu0 %v2309
        %v2338 = vpop.f32.mrf.mxu0
        %v2339 = vadd.f32 0.0, %v2338
        %v2340 = vpop.f32.mrf.mxu0
        %v2341 = vadd.f32 0.0, %v2340
        %2342 = vdwg.mxu0
        %v2343 = vadd.f32 %v2149, %v2324
        %v2344 = vadd.f32 %v2150, %v2326
        %v2345 = vadd.f32 %v2151, %v2329
        %v2346 = vadd.f32 %v2152, %v2331
        %v2347 = vadd.f32 %v2153, %v2334
        %v2348 = vadd.f32 %v2154, %v2336
        %v2349 = vadd.f32 %v2155, %v2339
        %v2350 = vadd.f32 %v2156, %v2341
        %v2351 = vadd.f32 %v2343, %v2344
        %v2352 = vadd.f32 %v2351, %v2345
        %v2353 = vadd.f32 %v2352, %v2346
        %v2354 = vadd.f32 %v2353, %v2347
        %v2355 = vadd.f32 %v2354, %v2348
        %v2356 = vadd.f32 %v2355, %v2349
        %v2357 = vadd.f32 %v2356, %v2350
        %v2358 = vrot.slane %v2357, 4
        %v2359 = vadd.f32 %v2357, %v2358
        %v2360 = vrot.slane %v2359, 2
        %v2361 = vadd.f32 %v2359, %v2360
        %v2362 = vrot.slane %v2361, 1
        %v2363 = vadd.f32 %v2361, %v2362
        %v2364 = vmul.f32 %v2343, %v2343
        %v2365 = vmul.f32 %v2344, %v2344
        %v2366 = vmul.f32 %v2345, %v2345
        %v2367 = vmul.f32 %v2346, %v2346
        %v2368 = vmul.f32 %v2347, %v2347
        %v2369 = vmul.f32 %v2348, %v2348
        %v2370 = vmul.f32 %v2349, %v2349
        %v2371 = vmul.f32 %v2350, %v2350
        %v2372 = vadd.f32 %v2364, %v2365
        %v2373 = vadd.f32 %v2372, %v2366
        %v2374 = vadd.f32 %v2373, %v2367
        %v2375 = vadd.f32 %v2374, %v2368
        %v2376 = vadd.f32 %v2375, %v2369
        %v2377 = vadd.f32 %v2376, %v2370
        %v2378 = vadd.f32 %v2377, %v2371
        %v2379 = vrot.slane %v2378, 4
        %v2380 = vadd.f32 %v2378, %v2379
        %v2381 = vrot.slane %v2380, 2
        %v2382 = vadd.f32 %v2380, %v2381
        %v2383 = vrot.slane %v2382, 1
        %v2384 = vadd.f32 %v2382, %v2383
        %v2385 = vmul.f32 %v2363, 0.015625
        %v2386 = vmul.f32 %v2384, 0.015625
        %v2387 = vmul.f32 %v2385, %v2385
        %v2388 = vsub.f32 %v2386, %v2387
        %v2389 = vmax.f32 %v2388, 0.0
        %v2390 = vsub.f32 %v2343, %v2385
        %v2391 = vsub.f32 %v2344, %v2385
        %v2392 = vsub.f32 %v2345, %v2385
        %v2393 = vsub.f32 %v2346, %v2385
        %v2394 = vsub.f32 %v2347, %v2385
        %v2395 = vsub.f32 %v2348, %v2385
        %v2396 = vsub.f32 %v2349, %v2385
        %v2397 = vsub.f32 %v2350, %v2385
        %v2398 = vadd.f32 %v2389, 1e-05
        %v2399 = vrsqrt.pop %v2398
        %v2400 = vmul.f32 %v2399, %v2398
        %v2401 = vmul.f32 %v2400, %v2399
        %v2402 = vmul.f32 0.5, %v2401
        %v2403 = vsub.f32 1.5, %v2402
        %v2404 = vmul.f32 %v2399, %v2403
        %vm2405 = vweird.f32 %v2398
        %vm2406 = vweird.f32 %v2399
        %vm2407 = vmor %vm2405, %vm2406
        %v2408 = vsel %vm2407, %v2399, %v2404
        %v2409 = vmul.f32 %v2390, %v2408
        %v2410 = vmul.f32 %v2391, %v2408
        %v2411 = vmul.f32 %v2392, %v2408
        %v2412 = vmul.f32 %v2393, %v2408
        %v2413 = vmul.f32 %v2394, %v2408
        %v2414 = vmul.f32 %v2395, %v2408
        %v2415 = vmul.f32 %v2396, %v2408
        %v2416 = vmul.f32 %v2397, %v2408
        %vm2417 = vcmp.ge.f32.partialorder %v2409, 0.0
        %vm2418 = vcmp.ge.f32.partialorder %v2410, 0.0
        %vm2419 = vcmp.ge.f32.partialorder %v2411, 0.0
        %vm2420 = vcmp.ge.f32.partialorder %v2412, 0.0
        %vm2421 = vcmp.ge.f32.partialorder %v2413, 0.0
        %vm2422 = vcmp.ge.f32.partialorder %v2414, 0.0
        %vm2423 = vcmp.ge.f32.partialorder %v2415, 0.0
        %vm2424 = vcmp.ge.f32.partialorder %v2416, 0.0
        %v2425 = vmul.f32 %v2409, 0.2
        %v2426 = vmul.f32 %v2410, 0.2
        %v2427 = vmul.f32 %v2411, 0.2
        %v2428 = vmul.f32 %v2412, 0.2
        %v2429 = vmul.f32 %v2413, 0.2
        %v2430 = vmul.f32 %v2414, 0.2
        %v2431 = vmul.f32 %v2415, 0.2
        %v2432 = vmul.f32 %v2416, 0.2
        %v2433 = vsel %vm2417, %v2409, %v2425
        %v2434 = vsel %vm2418, %v2410, %v2426
        %v2435 = vsel %vm2419, %v2411, %v2427
        %v2436 = vsel %vm2420, %v2412, %v2428
        %v2437 = vsel %vm2421, %v2413, %v2429
        %v2438 = vsel %vm2422, %v2414, %v2430
        %v2439 = vsel %vm2423, %v2415, %v2431
        %v2440 = vsel %vm2424, %v2416, %v2432
        %2441 = vst [vmem:[%s139] sm:$0xff] %v2433
        %2442 = vst [vmem:[%s139 + $0x8] sm:$0xff] %v2434
        %2443 = vst [vmem:[%s139 + $0x10] sm:$0xff] %v2435
        %2444 = vst [vmem:[%s139 + $0x18] sm:$0xff] %v2436
        %2445 = vst [vmem:[%s139 + $0x20] sm:$0xff] %v2437
        %2446 = vst [vmem:[%s139 + $0x28] sm:$0xff] %v2438
        %2447 = vst [vmem:[%s139 + $0x30] sm:$0xff] %v2439
        %2448 = vst [vmem:[%s139 + $0x38] sm:$0xff] %v2440
        %s2449 = sand.u32 %s71, 1
        %s2450 = scalar_lea.sflag [#allocation3], %s2449
        %s2451 = sand.u32 %s71, 1
        %s2452 = smul.addr %s2451, 64
        %s2453 = scalar_lea.vmem [#allocation2], %s2452
        // Predicated region
        $region29: #{tpu_custom_call.1} parent=27 // pred_check
          %p2454 = pneg %p81
        $region30: #{tpu_custom_call.1} parent=27 // pred_check_branch
          %2456 = sbr.rel (%p2454) target = $region32
        $region31: #{tpu_custom_call.1} parent=27 // pred_region
          %2458 = vsyncadd %s2450, 0
          %s2459 = smul.addr %s16, 8
          %s2460 = smul.addr %s2459, 8
          %s2461 = scalar_lea.hbm %s2, %s2460
          %s2462 = sshll.u32 %s2453, 4
          %s2463 = int_to_ptr.vmem [resolvable:$true] %s2462
          %s2464 = sshll.u32 %s2461, 4
          %s2465 = int_to_ptr.hbm [resolvable:$true] %s2464
          %2470 = dma.vmem_to_hbm [thread:$0]  %s2463, 1024, %s2465, %s2450, 128, 128, 8
        $region32: #{tpu_custom_call.1} parent=27 // pred_fallthru
          _
      $region28: #{tpu_custom_call.1} parent=5 // pred_fallthru
        _
      %p2471 = scmp.le.s32.totalorder 2, %s11
      // Predicated region
      $region33: #{tpu_custom_call.1} parent=5 // pred_check
        %p2472 = pneg %p2471
      $region34: #{tpu_custom_call.1} parent=5 // pred_check_branch
        %2474 = sbr.rel (%p2472) target = $region36
      $region35: #{tpu_custom_call.1} parent=5 // pred_region
        %s2475 = ssub.s32 %s11, 2
        // Predicated region
        $region37: #{tpu_custom_call.1} parent=35 // pred_check
          %p2476 = pneg %p87
        $region38: #{tpu_custom_call.1} parent=35 // pred_check_branch
          %2478 = sbr.rel (%p2476) target = $region40
        $region39: #{tpu_custom_call.1} parent=35 // pred_region
          %s2479 = sand.u32 %s72, 1
          %s2480 = scalar_lea.sflag [#allocation3], %s2479
          %s2481 = sand.u32 %s72, 1
          %s2482 = smul.addr %s2481, 64
          %s2483 = scalar_lea.vmem [#allocation2], %s2482
          %2485 = dma.done %s2480, 1024
        $region40: #{tpu_custom_call.1} parent=35 // pred_fallthru
          _
      $region36: #{tpu_custom_call.1} parent=5 // pred_fallthru
        _
    $region6: #{tpu_custom_call.1} parent=1 // loop_footer
      %s15 = sadd.s32 1, %s11
    $region7: #{tpu_custom_call.1} parent=1 // loop_footer_branch
      %10 = sbr.rel target = $region3
    $region8: #{tpu_custom_call.1} parent=1 // loop_exit
      _
    %2486 = vsyncpa [#allocation3], 1
    %s2487 = scalar_lea.sflag [#allocation3], 1
    %2488 = vsyncpa %s2487, 1

</llo_original>
